<compile_context>
chip_gen: v6e
topology: v6e:2x2x1
jax: 0.10.0
libtpu: 0.0.40
codegen_flags: <defaults>
</compile_context>

<pallas_src>
import functools

import jax
import jax.numpy as jnp
from jax.experimental import pallas as pl
from jax.experimental.pallas import tpu as pltpu


# Miniature EfficientNet-style dims (classifier -> EMB=512 as in the module).
C_IN, C_STEM, C_EXP, C_SE, C_HEAD, EMB = 3, 32, 64, 8, 128, 512
K_STEM = 32            # 3*3*C_IN = 27 stem-patch columns, zero-padded to 32

# --- f32 vector slab rows (shape [V_ROWS, 512]) ------------------------------
V_STEM_S, V_STEM_B = 0, 1
V_EXP_S, V_EXP_B = 2, 3
V_DW_S, V_DW_B = 4, 5
V_SE1_B, V_SE2_B = 6, 7
V_PROJ_S, V_PROJ_B = 8, 9
V_HEAD_S, V_HEAD_B = 10, 11
V_CLS_B = 12
V_DW_W = 13            # rows 13..21: the 9 depthwise 3x3 taps ([C_EXP] each)
V_ROWS = 24

# --- bf16 small-weight slab rows (shape [W_ROWS, 128]), 16-row aligned -------
W_STEM = 0             # [K_STEM, C_STEM]   (rows 27..31 are zero padding)
W_EXP = 32             # [C_STEM, C_EXP]
W_SE1 = 64             # [C_EXP,  C_SE]
W_SE2 = 128            # [C_SE,   C_EXP]
W_PROJ = 144           # [C_EXP,  C_STEM]
W_HEAD = 208           # [C_STEM, C_HEAD]
W_ROWS = 240


def _silu(v):
    return v * jax.nn.sigmoid(v)


# ----------------------------------------------------------------------------
# Fused whole-network kernel: one grid step == whole (folded) batch.
# ----------------------------------------------------------------------------
def _fused_forward_kernel(
    patches_ref,          # [N*HW, K_STEM] f32   im2col stem patches
    vec_ref,              # [V_ROWS, 512]  f32   BN scale/bias, biases, dw taps
    wp_ref,               # [W_ROWS, 128]  bf16  packed small matmul weights
    cls_w_ref,            # [C_HEAD, EMB]  bf16  classifier weight
    out_ref,              # [N, EMB]       f32
    pad_ref,              # VMEM scratch [N, H+2, W+2, C_EXP] f32
    *, N, H, W,
):
    f32 = jnp.float32
    HW = H * W
    M = N * HW

    def mm(a, w):
        # MXU matmul in bf16, f32 accumulation; elementwise math stays f32.
        return jnp.dot(a.astype(jnp.bfloat16), w, preferred_element_type=f32)

    def vec(row, c):                       # [1, c] f32 row from the vec slab
        return vec_ref[row:row + 1, 0:c]

    def wgt(row0, rows, cols):             # [rows, cols] bf16 weight block
        return wp_ref[row0:row0 + rows, 0:cols]

    # --- stem: 3x3 s2 conv (im2col matmul) + folded BN + SiLU epilogue
    x1 = _silu(mm(patches_ref[...], wgt(W_STEM, K_STEM, C_STEM))
               * vec(V_STEM_S, C_STEM) + vec(V_STEM_B, C_STEM))       # [M,32]

    # --- MBConv expand 1x1 + BN + SiLU
    e = _silu(mm(x1, wgt(W_EXP, C_STEM, C_EXP))
              * vec(V_EXP_S, C_EXP) + vec(V_EXP_B, C_EXP))            # [M,64]

    # --- depthwise 3x3 (stride 1, pad 1); padded tensor lives only in VMEM.
    # Zeroed once (single grid step); interior overwritten with the expand out.
    pad_ref[...] = jnp.zeros_like(pad_ref)
    pad_ref[:, 1:1 + H, 1:1 + W, :] = e.reshape(N, H, W, C_EXP)
    acc = jnp.zeros((N * H, W, C_EXP), f32)
    for dy in range(3):
        # Full lane/sublane-extent read (slice only the leading image-row axis)
        band = pad_ref[:, dy:dy + H, :, :].reshape(N * H, W + 2, C_EXP)
        for dx in range(3):
            t = V_DW_W + dy * 3 + dx
            tap = vec_ref[t:t + 1, 0:C_EXP].reshape(1, 1, C_EXP)
            acc = acc + band[:, dx:dx + W, :] * tap
    d = _silu(acc.reshape(M, C_EXP) * vec(V_DW_S, C_EXP)
              + vec(V_DW_B, C_EXP))                                   # [M,64]

    # --- squeeze-and-excite (per-image pool -> FC -> SiLU -> FC -> sigmoid)
    d3 = d.reshape(N, HW, C_EXP)
    pooled = jnp.mean(d3, axis=1)                                     # [N,64]
    s = _silu(mm(pooled, wgt(W_SE1, C_EXP, C_SE)) + vec(V_SE1_B, C_SE))
    g = jax.nn.sigmoid(mm(s, wgt(W_SE2, C_SE, C_EXP)) + vec(V_SE2_B, C_EXP))
    scaled = (d3 * g[:, None, :]).reshape(M, C_EXP)                   # [M,64]

    # --- project 1x1 + BN with fused residual add
    x2 = (mm(scaled, wgt(W_PROJ, C_EXP, C_STEM)) * vec(V_PROJ_S, C_STEM)
          + vec(V_PROJ_B, C_STEM) + x1)                               # [M,32]

    # --- conv head 1x1 + BN + SiLU
    h = _silu(mm(x2, wgt(W_HEAD, C_STEM, C_HEAD))
              * vec(V_HEAD_S, C_HEAD) + vec(V_HEAD_B, C_HEAD))        # [M,128]

    # --- global average pool + classifier Linear(in_features, 512)
    hp = jnp.mean(h.reshape(N, HW, C_HEAD), axis=1)                   # [N,128]
    out_ref[...] = mm(hp, cls_w_ref[...]) + vec(V_CLS_B, EMB)         # [N,512]


# ----------------------------------------------------------------------------
# Plain-JAX glue: im2col for the stem (pure layout plumbing, fused under jit).
# ----------------------------------------------------------------------------
def im2col(x_nhwc, kh, kw, stride, pad):
    x = jnp.pad(x_nhwc, ((0, 0), (pad, pad), (pad, pad), (0, 0)))
    N, Hp, Wp, C = x.shape
    Ho = (Hp - kh) // stride + 1
    Wo = (Wp - kw) // stride + 1
    cols = []
    for dy in range(kh):
        for dx in range(kw):
            cols.append(
                x[:, dy:dy + Ho * stride:stride, dx:dx + Wo * stride:stride, :]
            )
    patches = jnp.stack(cols, axis=3)  # [N, Ho, Wo, kh*kw, C]
    return patches.reshape(N * Ho * Wo, kh * kw * C), Ho, Wo


# ----------------------------------------------------------------------------
# Deterministic parameter init + packing into the three kernel slabs.
# ----------------------------------------------------------------------------
def init_params(key):
    ks = jax.random.split(key, 16)

    def bn(k, c):
        k1, k2, k3, k4 = jax.random.split(k, 4)
        gamma = jax.random.uniform(k1, (c,), jnp.float32, 0.5, 1.5)
        beta = 0.1 * jax.random.normal(k2, (c,), jnp.float32)
        mean = 0.1 * jax.random.normal(k3, (c,), jnp.float32)
        var = jax.random.uniform(k4, (c,), jnp.float32, 0.5, 1.5)
        scale = gamma / jnp.sqrt(var + 1e-5)
        bias = beta - mean * scale
        return scale, bias

    def w(k, shape, fan_in):
        return jax.random.normal(k, shape, jnp.float32) / jnp.sqrt(fan_in)

    stem_w = w(ks[0], (3 * 3 * C_IN, C_STEM), 3 * 3 * C_IN)
    stem_s, stem_b = bn(ks[1], C_STEM)
    exp_w = w(ks[2], (C_STEM, C_EXP), C_STEM)
    exp_s, exp_b = bn(ks[3], C_EXP)
    dw_w = w(ks[4], (9, C_EXP), 9)
    dw_s, dw_b = bn(ks[5], C_EXP)
    se1_w = w(ks[6], (C_EXP, C_SE), C_EXP)
    se1_b = 0.1 * jax.random.normal(ks[7], (C_SE,), jnp.float32)
    se2_w = w(ks[8], (C_SE, C_EXP), C_SE)
    se2_b = 0.1 * jax.random.normal(ks[9], (C_EXP,), jnp.float32)
    proj_w = w(ks[10], (C_EXP, C_STEM), C_EXP)
    proj_s, proj_b = bn(ks[11], C_STEM)
    head_w = w(ks[12], (C_STEM, C_HEAD), C_STEM)
    head_s, head_b = bn(ks[13], C_HEAD)
    cls_w = w(ks[14], (C_HEAD, EMB), C_HEAD)
    cls_b = 0.1 * jax.random.normal(ks[15], (EMB,), jnp.float32)

    # f32 vector slab: BN scale/bias, FC biases, depthwise taps (row indexed)
    vecs = jnp.zeros((V_ROWS, EMB), jnp.float32)
    rows = [(V_STEM_S, stem_s), (V_STEM_B, stem_b),
            (V_EXP_S, exp_s), (V_EXP_B, exp_b),
            (V_DW_S, dw_s), (V_DW_B, dw_b),
            (V_SE1_B, se1_b), (V_SE2_B, se2_b),
            (V_PROJ_S, proj_s), (V_PROJ_B, proj_b),
            (V_HEAD_S, head_s), (V_HEAD_B, head_b),
            (V_CLS_B, cls_b)]
    rows += [(V_DW_W + t, dw_w[t]) for t in range(9)]
    for r, v in rows:
        vecs = vecs.at[r, :v.shape[0]].set(v)

    # bf16 small-weight slab (16-row-aligned blocks, zero padded)
    wsmall = jnp.zeros((W_ROWS, C_HEAD), jnp.float32)

    def putw(slab, r0, w2d):
        return slab.at[r0:r0 + w2d.shape[0], :w2d.shape[1]].set(w2d)

    wsmall = putw(wsmall, W_STEM, stem_w)   # 27 real rows; 27..31 stay zero
    wsmall = putw(wsmall, W_EXP, exp_w)
    wsmall = putw(wsmall, W_SE1, se1_w)
    wsmall = putw(wsmall, W_SE2, se2_w)
    wsmall = putw(wsmall, W_PROJ, proj_w)
    wsmall = putw(wsmall, W_HEAD, head_w)

    return {"vecs": vecs,
            "wsmall": wsmall.astype(jnp.bfloat16),
            "cls_w": cls_w.astype(jnp.bfloat16)}


# ----------------------------------------------------------------------------
# Forward pass (mirrors Model.forward -> self.eff(x) -> [N, 512] embeddings)
# ----------------------------------------------------------------------------
def _efficientnet_forward(x_nchw, params):
    vecs, wsmall, cls_w = params["vecs"], params["wsmall"], params["cls_w"]

    # NCHW (PyTorch) -> NHWC (kernel layout)
    x = jnp.transpose(x_nchw, (0, 2, 3, 1)).astype(jnp.float32)
    N = x.shape[0]

    # im2col for the stem 3x3 stride-2 conv; pad K 27 -> 32 (weight rows are 0)
    patches, Ho, Wo = im2col(x, 3, 3, stride=2, pad=1)   # [N*Ho*Wo, 27]
    patches = jnp.pad(patches, ((0, 0), (0, K_STEM - patches.shape[1])))
    HW = Ho * Wo
    M = N * HW

    flops = int(
        2 * M * (K_STEM * C_STEM + C_STEM * C_EXP + C_EXP * C_STEM
                 + C_STEM * C_HEAD + 9 * C_EXP)
        + 2 * N * (C_EXP * C_SE + C_SE * C_EXP + C_HEAD * EMB))
    transcendentals = int(M * (C_STEM + 2 * C_EXP + C_HEAD)
                          + N * (C_SE + C_EXP))
    bytes_accessed = int(patches.size * 4 + vecs.size * 4
                         + wsmall.size * 2 + cls_w.size * 2 + N * EMB * 4)

    # Single grid step: whole batch folded into M=N*HW.  At real EfficientNet
    # sizes / larger N this would become a parallel grid over 256-row blocks
    # (v7x: one half-batch block per TensorCore).
    out = pl.pallas_call(
        functools.partial(_fused_forward_kernel, N=N, H=Ho, W=Wo),
        out_shape=jax.ShapeDtypeStruct((N, EMB), jnp.float32),
        grid=(1,),
        in_specs=[
            pl.BlockSpec((M, K_STEM), lambda i: (0, 0)),
            pl.BlockSpec(vecs.shape, lambda i: (0, 0)),
            pl.BlockSpec(wsmall.shape, lambda i: (0, 0)),
            pl.BlockSpec(cls_w.shape, lambda i: (0, 0)),
        ],
        out_specs=pl.BlockSpec((N, EMB), lambda i: (0, 0)),
        scratch_shapes=[pltpu.VMEM((N, Ho + 2, Wo + 2, C_EXP), jnp.float32)],
        compiler_params=pltpu.CompilerParams(
            dimension_semantics=("arbitrary",)),
        cost_estimate=pl.CostEstimate(
            flops=flops, transcendentals=transcendentals,
            bytes_accessed=bytes_accessed),
    )(patches, vecs, wsmall, cls_w)
    return out


model_forward = jax.jit(_efficientnet_forward)


# TODO(synk): pretrained timm EfficientNet weights cannot be reproduced
# in-script; the backbone here is a structurally equivalent, deterministically
# initialized miniature version.

if __name__ == "__main__":
    key = jax.random.PRNGKey(0)
    kx, kp = jax.random.split(key)
    x = jax.random.normal(kx, (2, 3, 16, 16), jnp.float32)  # NCHW like PyTorch
    params = init_params(kp)

    out = model_forward(x, params)
    out = jax.block_until_ready(out)
    assert out.shape == (2, 512) and out.dtype == jnp.float32
    print("KERNEL_OK")
</pallas_src>

<mosaic_0001>
module attributes {stable_mosaic.version = 11 : i64} {
  func.func @_fused_forward_kernel(%arg0: i32, %arg1: memref<128x32xf32, #tpu.memory_space<vmem>>, %arg2: memref<24x512xf32, #tpu.memory_space<vmem>>, %arg3: memref<240x128xbf16, #tpu.memory_space<vmem>>, %arg4: memref<128x512xbf16, #tpu.memory_space<vmem>>, %arg5: memref<2x512xf32, #tpu.memory_space<vmem>>, %arg6: memref<2x10x10x64xf32, #tpu.memory_space<vmem>>) attributes {dimension_semantics = [#tpu.dimension_semantics<arbitrary>], iteration_bounds = array<i64: 1>, scalar_prefetch = 0 : i64, scratch_operands = 1 : i64, tpu.core_type = #tpu.core_type<tc>, window_params = [{pipeline_mode = #tpu.pipeline_mode<synchronous>, transform_indices = @transform_0, window_bounds = array<i64: 128, 32>}, {pipeline_mode = #tpu.pipeline_mode<synchronous>, transform_indices = @transform_1, window_bounds = array<i64: 24, 512>}, {pipeline_mode = #tpu.pipeline_mode<synchronous>, transform_indices = @transform_2, window_bounds = array<i64: 240, 128>}, {pipeline_mode = #tpu.pipeline_mode<synchronous>, transform_indices = @transform_3, window_bounds = array<i64: 128, 512>}, {pipeline_mode = #tpu.pipeline_mode<synchronous>, transform_indices = @transform_4, window_bounds = array<i64: 2, 512>}]} {
    %c0 = arith.constant 0 : index
    %c0_0 = arith.constant 0 : index
    %0 = vector.load %arg1[%c0, %c0_0] : memref<128x32xf32, #tpu.memory_space<vmem>>, vector<128x32xf32>
    %c0_1 = arith.constant 0 : index
    %c0_2 = arith.constant 0 : index
    %1 = vector.load %arg3[%c0_1, %c0_2] : memref<240x128xbf16, #tpu.memory_space<vmem>>, vector<32x32xbf16>
    %2 = arith.truncf %0 : vector<128x32xf32> to vector<128x32xbf16>
    %cst = arith.constant dense<0.000000e+00> : vector<128x32xf32>
    %3 = tpu.matmul %2, %1, %cst {dimension_numbers = #tpu.dot_dimension_numbers<[1], [0], [0], [1], [0, 0, 1, 1], [], []>} : vector<128x32xbf16>, vector<32x32xbf16>, vector<128x32xf32> -> vector<128x32xf32>
    %c0_3 = arith.constant 0 : index
    %c0_4 = arith.constant 0 : index
    %4 = vector.load %arg2[%c0_3, %c0_4] : memref<24x512xf32, #tpu.memory_space<vmem>>, vector<1x32xf32>
    %5 = vector.broadcast %4 : vector<1x32xf32> to vector<128x32xf32>
    %6 = arith.mulf %3, %5 : vector<128x32xf32>
    %c1 = arith.constant 1 : index
    %c0_5 = arith.constant 0 : index
    %7 = vector.load %arg2[%c1, %c0_5] : memref<24x512xf32, #tpu.memory_space<vmem>>, vector<1x32xf32>
    %8 = vector.broadcast %7 : vector<1x32xf32> to vector<128x32xf32>
    %9 = arith.addf %6, %8 : vector<128x32xf32>
    %10 = arith.negf %9 : vector<128x32xf32>
    %11 = math.exp %10 : vector<128x32xf32>
    %cst_6 = arith.constant 1.000000e+00 : f32
    %12 = vector.broadcast %cst_6 : f32 to vector<128x32xf32>
    %13 = arith.addf %12, %11 : vector<128x32xf32>
    %14 = arith.divf %12, %13 : vector<128x32xf32>
    %15 = arith.mulf %9, %14 : vector<128x32xf32>
    %c32 = arith.constant 32 : index
    %c0_7 = arith.constant 0 : index
    %16 = vector.load %arg3[%c32, %c0_7] : memref<240x128xbf16, #tpu.memory_space<vmem>>, vector<32x64xbf16>
    %17 = arith.truncf %15 : vector<128x32xf32> to vector<128x32xbf16>
    %cst_8 = arith.constant dense<0.000000e+00> : vector<128x64xf32>
    %18 = tpu.matmul %17, %16, %cst_8 {dimension_numbers = #tpu.dot_dimension_numbers<[1], [0], [0], [1], [0, 0, 1, 1], [], []>} : vector<128x32xbf16>, vector<32x64xbf16>, vector<128x64xf32> -> vector<128x64xf32>
    %c2 = arith.constant 2 : index
    %c0_9 = arith.constant 0 : index
    %19 = vector.load %arg2[%c2, %c0_9] : memref<24x512xf32, #tpu.memory_space<vmem>>, vector<1x64xf32>
    %20 = vector.broadcast %19 : vector<1x64xf32> to vector<128x64xf32>
    %21 = arith.mulf %18, %20 : vector<128x64xf32>
    %c3 = arith.constant 3 : index
    %c0_10 = arith.constant 0 : index
    %22 = vector.load %arg2[%c3, %c0_10] : memref<24x512xf32, #tpu.memory_space<vmem>>, vector<1x64xf32>
    %23 = vector.broadcast %22 : vector<1x64xf32> to vector<128x64xf32>
    %24 = arith.addf %21, %23 : vector<128x64xf32>
    %25 = arith.negf %24 : vector<128x64xf32>
    %26 = math.exp %25 : vector<128x64xf32>
    %cst_11 = arith.constant 1.000000e+00 : f32
    %27 = vector.broadcast %cst_11 : f32 to vector<128x64xf32>
    %28 = arith.addf %27, %26 : vector<128x64xf32>
    %29 = arith.divf %27, %28 : vector<128x64xf32>
    %30 = arith.mulf %24, %29 : vector<128x64xf32>
    %cst_12 = arith.constant 0.000000e+00 : f32
    %31 = vector.broadcast %cst_12 : f32 to vector<2x10x10x64xf32>
    %c0_13 = arith.constant 0 : index
    %c0_14 = arith.constant 0 : index
    %c0_15 = arith.constant 0 : index
    %c0_16 = arith.constant 0 : index
    %32 = vector.load %arg6[%c0_13, %c0_14, %c0_15, %c0_16] : memref<2x10x10x64xf32, #tpu.memory_space<vmem>>, vector<2x10x10x64xf32>
    tpu.vector_store %arg6[%c0_13, %c0_14, %c0_15, %c0_16], %31 {strides = array<i32>} : memref<2x10x10x64xf32, #tpu.memory_space<vmem>>, vector<2x10x10x64xf32>,
    %33 = vector.shape_cast %30 : vector<128x64xf32> to vector<2x8x8x64xf32>
    %c0_17 = arith.constant 0 : index
    %c1_18 = arith.constant 1 : index
    %c1_19 = arith.constant 1 : index
    %c0_20 = arith.constant 0 : index
    %34 = vector.load %arg6[%c0_17, %c1_18, %c1_19, %c0_20] : memref<2x10x10x64xf32, #tpu.memory_space<vmem>>, vector<2x8x8x64xf32>
    tpu.vector_store %arg6[%c0_17, %c1_18, %c1_19, %c0_20], %33 {strides = array<i32>} : memref<2x10x10x64xf32, #tpu.memory_space<vmem>>, vector<2x8x8x64xf32>,
    %cst_21 = arith.constant 0.000000e+00 : f32
    %35 = vector.broadcast %cst_21 : f32 to vector<16x8x64xf32>
    %c0_22 = arith.constant 0 : index
    %c0_23 = arith.constant 0 : index
    %c0_24 = arith.constant 0 : index
    %c0_25 = arith.constant 0 : index
    %36 = vector.load %arg6[%c0_22, %c0_23, %c0_24, %c0_25] : memref<2x10x10x64xf32, #tpu.memory_space<vmem>>, vector<2x8x10x64xf32>
    %37 = vector.shape_cast %36 : vector<2x8x10x64xf32> to vector<16x10x64xf32>
    %c13 = arith.constant 13 : index
    %c0_26 = arith.constant 0 : index
    %38 = vector.load %arg2[%c13, %c0_26] : memref<24x512xf32, #tpu.memory_space<vmem>>, vector<1x64xf32>
    %39 = vector.shape_cast %38 : vector<1x64xf32> to vector<1x1x64xf32>
    %40 = vector.extract_strided_slice %37 {offsets = [0, 0, 0], sizes = [16, 8, 64], strides = [1, 1, 1]} : vector<16x10x64xf32> to vector<16x8x64xf32>
    %41 = vector.broadcast %39 : vector<1x1x64xf32> to vector<16x8x64xf32>
    %42 = arith.mulf %40, %41 : vector<16x8x64xf32>
    %43 = arith.addf %35, %42 : vector<16x8x64xf32>
    %c14 = arith.constant 14 : index
    %c0_27 = arith.constant 0 : index
    %44 = vector.load %arg2[%c14, %c0_27] : memref<24x512xf32, #tpu.memory_space<vmem>>, vector<1x64xf32>
    %45 = vector.shape_cast %44 : vector<1x64xf32> to vector<1x1x64xf32>
    %46 = vector.extract_strided_slice %37 {offsets = [0, 1, 0], sizes = [16, 8, 64], strides = [1, 1, 1]} : vector<16x10x64xf32> to vector<16x8x64xf32>
    %47 = vector.broadcast %45 : vector<1x1x64xf32> to vector<16x8x64xf32>
    %48 = arith.mulf %46, %47 : vector<16x8x64xf32>
    %49 = arith.addf %43, %48 : vector<16x8x64xf32>
    %c15 = arith.constant 15 : index
    %c0_28 = arith.constant 0 : index
    %50 = vector.load %arg2[%c15, %c0_28] : memref<24x512xf32, #tpu.memory_space<vmem>>, vector<1x64xf32>
    %51 = vector.shape_cast %50 : vector<1x64xf32> to vector<1x1x64xf32>
    %52 = vector.extract_strided_slice %37 {offsets = [0, 2, 0], sizes = [16, 8, 64], strides = [1, 1, 1]} : vector<16x10x64xf32> to vector<16x8x64xf32>
    %53 = vector.broadcast %51 : vector<1x1x64xf32> to vector<16x8x64xf32>
    %54 = arith.mulf %52, %53 : vector<16x8x64xf32>
    %55 = arith.addf %49, %54 : vector<16x8x64xf32>
    %c0_29 = arith.constant 0 : index
    %c1_30 = arith.constant 1 : index
    %c0_31 = arith.constant 0 : index
    %c0_32 = arith.constant 0 : index
    %56 = vector.load %arg6[%c0_29, %c1_30, %c0_31, %c0_32] : memref<2x10x10x64xf32, #tpu.memory_space<vmem>>, vector<2x8x10x64xf32>
    %57 = vector.shape_cast %56 : vector<2x8x10x64xf32> to vector<16x10x64xf32>
    %c16 = arith.constant 16 : index
    %c0_33 = arith.constant 0 : index
    %58 = vector.load %arg2[%c16, %c0_33] : memref<24x512xf32, #tpu.memory_space<vmem>>, vector<1x64xf32>
    %59 = vector.shape_cast %58 : vector<1x64xf32> to vector<1x1x64xf32>
    %60 = vector.extract_strided_slice %57 {offsets = [0, 0, 0], sizes = [16, 8, 64], strides = [1, 1, 1]} : vector<16x10x64xf32> to vector<16x8x64xf32>
    %61 = vector.broadcast %59 : vector<1x1x64xf32> to vector<16x8x64xf32>
    %62 = arith.mulf %60, %61 : vector<16x8x64xf32>
    %63 = arith.addf %55, %62 : vector<16x8x64xf32>
    %c17 = arith.constant 17 : index
    %c0_34 = arith.constant 0 : index
    %64 = vector.load %arg2[%c17, %c0_34] : memref<24x512xf32, #tpu.memory_space<vmem>>, vector<1x64xf32>
    %65 = vector.shape_cast %64 : vector<1x64xf32> to vector<1x1x64xf32>
    %66 = vector.extract_strided_slice %57 {offsets = [0, 1, 0], sizes = [16, 8, 64], strides = [1, 1, 1]} : vector<16x10x64xf32> to vector<16x8x64xf32>
    %67 = vector.broadcast %65 : vector<1x1x64xf32> to vector<16x8x64xf32>
    %68 = arith.mulf %66, %67 : vector<16x8x64xf32>
    %69 = arith.addf %63, %68 : vector<16x8x64xf32>
    %c18 = arith.constant 18 : index
    %c0_35 = arith.constant 0 : index
    %70 = vector.load %arg2[%c18, %c0_35] : memref<24x512xf32, #tpu.memory_space<vmem>>, vector<1x64xf32>
    %71 = vector.shape_cast %70 : vector<1x64xf32> to vector<1x1x64xf32>
    %72 = vector.extract_strided_slice %57 {offsets = [0, 2, 0], sizes = [16, 8, 64], strides = [1, 1, 1]} : vector<16x10x64xf32> to vector<16x8x64xf32>
    %73 = vector.broadcast %71 : vector<1x1x64xf32> to vector<16x8x64xf32>
    %74 = arith.mulf %72, %73 : vector<16x8x64xf32>
    %75 = arith.addf %69, %74 : vector<16x8x64xf32>
    %c0_36 = arith.constant 0 : index
    %c2_37 = arith.constant 2 : index
    %c0_38 = arith.constant 0 : index
    %c0_39 = arith.constant 0 : index
    %76 = vector.load %arg6[%c0_36, %c2_37, %c0_38, %c0_39] : memref<2x10x10x64xf32, #tpu.memory_space<vmem>>, vector<2x8x10x64xf32>
    %77 = vector.shape_cast %76 : vector<2x8x10x64xf32> to vector<16x10x64xf32>
    %c19 = arith.constant 19 : index
    %c0_40 = arith.constant 0 : index
    %78 = vector.load %arg2[%c19, %c0_40] : memref<24x512xf32, #tpu.memory_space<vmem>>, vector<1x64xf32>
    %79 = vector.shape_cast %78 : vector<1x64xf32> to vector<1x1x64xf32>
    %80 = vector.extract_strided_slice %77 {offsets = [0, 0, 0], sizes = [16, 8, 64], strides = [1, 1, 1]} : vector<16x10x64xf32> to vector<16x8x64xf32>
    %81 = vector.broadcast %79 : vector<1x1x64xf32> to vector<16x8x64xf32>
    %82 = arith.mulf %80, %81 : vector<16x8x64xf32>
    %83 = arith.addf %75, %82 : vector<16x8x64xf32>
    %c20 = arith.constant 20 : index
    %c0_41 = arith.constant 0 : index
    %84 = vector.load %arg2[%c20, %c0_41] : memref<24x512xf32, #tpu.memory_space<vmem>>, vector<1x64xf32>
    %85 = vector.shape_cast %84 : vector<1x64xf32> to vector<1x1x64xf32>
    %86 = vector.extract_strided_slice %77 {offsets = [0, 1, 0], sizes = [16, 8, 64], strides = [1, 1, 1]} : vector<16x10x64xf32> to vector<16x8x64xf32>
    %87 = vector.broadcast %85 : vector<1x1x64xf32> to vector<16x8x64xf32>
    %88 = arith.mulf %86, %87 : vector<16x8x64xf32>
    %89 = arith.addf %83, %88 : vector<16x8x64xf32>
    %c21 = arith.constant 21 : index
    %c0_42 = arith.constant 0 : index
    %90 = vector.load %arg2[%c21, %c0_42] : memref<24x512xf32, #tpu.memory_space<vmem>>, vector<1x64xf32>
    %91 = vector.shape_cast %90 : vector<1x64xf32> to vector<1x1x64xf32>
    %92 = vector.extract_strided_slice %77 {offsets = [0, 2, 0], sizes = [16, 8, 64], strides = [1, 1, 1]} : vector<16x10x64xf32> to vector<16x8x64xf32>
    %93 = vector.broadcast %91 : vector<1x1x64xf32> to vector<16x8x64xf32>
    %94 = arith.mulf %92, %93 : vector<16x8x64xf32>
    %95 = arith.addf %89, %94 : vector<16x8x64xf32>
    %96 = vector.shape_cast %95 : vector<16x8x64xf32> to vector<128x64xf32>
    %c4 = arith.constant 4 : index
    %c0_43 = arith.constant 0 : index
    %97 = vector.load %arg2[%c4, %c0_43] : memref<24x512xf32, #tpu.memory_space<vmem>>, vector<1x64xf32>
    %98 = vector.broadcast %97 : vector<1x64xf32> to vector<128x64xf32>
    %99 = arith.mulf %96, %98 : vector<128x64xf32>
    %c5 = arith.constant 5 : index
    %c0_44 = arith.constant 0 : index
    %100 = vector.load %arg2[%c5, %c0_44] : memref<24x512xf32, #tpu.memory_space<vmem>>, vector<1x64xf32>
    %101 = vector.broadcast %100 : vector<1x64xf32> to vector<128x64xf32>
    %102 = arith.addf %99, %101 : vector<128x64xf32>
    %103 = arith.negf %102 : vector<128x64xf32>
    %104 = math.exp %103 : vector<128x64xf32>
    %cst_45 = arith.constant 1.000000e+00 : f32
    %105 = vector.broadcast %cst_45 : f32 to vector<128x64xf32>
    %106 = arith.addf %105, %104 : vector<128x64xf32>
    %107 = arith.divf %105, %106 : vector<128x64xf32>
    %108 = arith.mulf %102, %107 : vector<128x64xf32>
    %109 = vector.shape_cast %108 : vector<128x64xf32> to vector<2x64x64xf32>
    %cst_46 = arith.constant dense<0.000000e+00> : vector<2x64xf32>
    %110 = vector.multi_reduction <add>, %109, %cst_46 [1] : vector<2x64x64xf32> to vector<2x64xf32>
    %cst_47 = arith.constant 6.400000e+01 : f32
    %111 = vector.broadcast %cst_47 : f32 to vector<2x64xf32>
    %112 = arith.divf %110, %111 : vector<2x64xf32>
    %c64 = arith.constant 64 : index
    %c0_48 = arith.constant 0 : index
    %113 = vector.load %arg3[%c64, %c0_48] : memref<240x128xbf16, #tpu.memory_space<vmem>>, vector<64x8xbf16>
    %114 = arith.truncf %112 : vector<2x64xf32> to vector<2x64xbf16>
    %cst_49 = arith.constant dense<0.000000e+00> : vector<2x8xf32>
    %115 = tpu.matmul %114, %113, %cst_49 {dimension_numbers = #tpu.dot_dimension_numbers<[1], [0], [0], [1], [0, 0, 1, 1], [], []>} : vector<2x64xbf16>, vector<64x8xbf16>, vector<2x8xf32> -> vector<2x8xf32>
    %c6 = arith.constant 6 : index
    %c0_50 = arith.constant 0 : index
    %116 = vector.load %arg2[%c6, %c0_50] : memref<24x512xf32, #tpu.memory_space<vmem>>, vector<1x8xf32>
    %117 = vector.broadcast %116 : vector<1x8xf32> to vector<2x8xf32>
    %118 = arith.addf %115, %117 : vector<2x8xf32>
    %119 = arith.negf %118 : vector<2x8xf32>
    %120 = math.exp %119 : vector<2x8xf32>
    %cst_51 = arith.constant 1.000000e+00 : f32
    %121 = vector.broadcast %cst_51 : f32 to vector<2x8xf32>
    %122 = arith.addf %121, %120 : vector<2x8xf32>
    %123 = arith.divf %121, %122 : vector<2x8xf32>
    %124 = arith.mulf %118, %123 : vector<2x8xf32>
    %c128 = arith.constant 128 : index
    %c0_52 = arith.constant 0 : index
    %125 = vector.load %arg3[%c128, %c0_52] : memref<240x128xbf16, #tpu.memory_space<vmem>>, vector<8x64xbf16>
    %126 = arith.truncf %124 : vector<2x8xf32> to vector<2x8xbf16>
    %cst_53 = arith.constant dense<0.000000e+00> : vector<2x64xf32>
    %127 = tpu.matmul %126, %125, %cst_53 {dimension_numbers = #tpu.dot_dimension_numbers<[1], [0], [0], [1], [0, 0, 1, 1], [], []>} : vector<2x8xbf16>, vector<8x64xbf16>, vector<2x64xf32> -> vector<2x64xf32>
    %c7 = arith.constant 7 : index
    %c0_54 = arith.constant 0 : index
    %128 = vector.load %arg2[%c7, %c0_54] : memref<24x512xf32, #tpu.memory_space<vmem>>, vector<1x64xf32>
    %129 = vector.broadcast %128 : vector<1x64xf32> to vector<2x64xf32>
    %130 = arith.addf %127, %129 : vector<2x64xf32>
    %131 = arith.negf %130 : vector<2x64xf32>
    %132 = math.exp %131 : vector<2x64xf32>
    %cst_55 = arith.constant 1.000000e+00 : f32
    %133 = vector.broadcast %cst_55 : f32 to vector<2x64xf32>
    %134 = arith.addf %133, %132 : vector<2x64xf32>
    %135 = arith.divf %133, %134 : vector<2x64xf32>
    %136 = vector.shape_cast %135 : vector<2x64xf32> to vector<2x1x64xf32>
    %137 = vector.broadcast %136 : vector<2x1x64xf32> to vector<2x64x64xf32>
    %138 = arith.mulf %109, %137 : vector<2x64x64xf32>
    %139 = vector.shape_cast %138 : vector<2x64x64xf32> to vector<128x64xf32>
    %c144 = arith.constant 144 : index
    %c0_56 = arith.constant 0 : index
    %140 = vector.load %arg3[%c144, %c0_56] : memref<240x128xbf16, #tpu.memory_space<vmem>>, vector<64x32xbf16>
    %141 = arith.truncf %139 : vector<128x64xf32> to vector<128x64xbf16>
    %cst_57 = arith.constant dense<0.000000e+00> : vector<128x32xf32>
    %142 = tpu.matmul %141, %140, %cst_57 {dimension_numbers = #tpu.dot_dimension_numbers<[1], [0], [0], [1], [0, 0, 1, 1], [], []>} : vector<128x64xbf16>, vector<64x32xbf16>, vector<128x32xf32> -> vector<128x32xf32>
    %c8 = arith.constant 8 : index
    %c0_58 = arith.constant 0 : index
    %143 = vector.load %arg2[%c8, %c0_58] : memref<24x512xf32, #tpu.memory_space<vmem>>, vector<1x32xf32>
    %144 = vector.broadcast %143 : vector<1x32xf32> to vector<128x32xf32>
    %145 = arith.mulf %142, %144 : vector<128x32xf32>
    %c9 = arith.constant 9 : index
    %c0_59 = arith.constant 0 : index
    %146 = vector.load %arg2[%c9, %c0_59] : memref<24x512xf32, #tpu.memory_space<vmem>>, vector<1x32xf32>
    %147 = vector.broadcast %146 : vector<1x32xf32> to vector<128x32xf32>
    %148 = arith.addf %145, %147 : vector<128x32xf32>
    %149 = arith.addf %148, %15 : vector<128x32xf32>
    %c208 = arith.constant 208 : index
    %c0_60 = arith.constant 0 : index
    %150 = vector.load %arg3[%c208, %c0_60] : memref<240x128xbf16, #tpu.memory_space<vmem>>, vector<32x128xbf16>
    %151 = arith.truncf %149 : vector<128x32xf32> to vector<128x32xbf16>
    %cst_61 = arith.constant dense<0.000000e+00> : vector<128x128xf32>
    %152 = tpu.matmul %151, %150, %cst_61 {dimension_numbers = #tpu.dot_dimension_numbers<[1], [0], [0], [1], [0, 0, 1, 1], [], []>} : vector<128x32xbf16>, vector<32x128xbf16>, vector<128x128xf32> -> vector<128x128xf32>
    %c10 = arith.constant 10 : index
    %c0_62 = arith.constant 0 : index
    %153 = vector.load %arg2[%c10, %c0_62] : memref<24x512xf32, #tpu.memory_space<vmem>>, vector<1x128xf32>
    %154 = vector.broadcast %153 : vector<1x128xf32> to vector<128x128xf32>
    %155 = arith.mulf %152, %154 : vector<128x128xf32>
    %c11 = arith.constant 11 : index
    %c0_63 = arith.constant 0 : index
    %156 = vector.load %arg2[%c11, %c0_63] : memref<24x512xf32, #tpu.memory_space<vmem>>, vector<1x128xf32>
    %157 = vector.broadcast %156 : vector<1x128xf32> to vector<128x128xf32>
    %158 = arith.addf %155, %157 : vector<128x128xf32>
    %159 = arith.negf %158 : vector<128x128xf32>
    %160 = math.exp %159 : vector<128x128xf32>
    %cst_64 = arith.constant 1.000000e+00 : f32
    %161 = vector.broadcast %cst_64 : f32 to vector<128x128xf32>
    %162 = arith.addf %161, %160 : vector<128x128xf32>
    %163 = arith.divf %161, %162 : vector<128x128xf32>
    %164 = arith.mulf %158, %163 : vector<128x128xf32>
    %165 = vector.shape_cast %164 : vector<128x128xf32> to vector<2x64x128xf32>
    %cst_65 = arith.constant dense<0.000000e+00> : vector<2x128xf32>
    %166 = vector.multi_reduction <add>, %165, %cst_65 [1] : vector<2x64x128xf32> to vector<2x128xf32>
    %cst_66 = arith.constant 6.400000e+01 : f32
    %167 = vector.broadcast %cst_66 : f32 to vector<2x128xf32>
    %168 = arith.divf %166, %167 : vector<2x128xf32>
    %c0_67 = arith.constant 0 : index
    %c0_68 = arith.constant 0 : index
    %169 = vector.load %arg4[%c0_67, %c0_68] : memref<128x512xbf16, #tpu.memory_space<vmem>>, vector<128x512xbf16>
    %170 = arith.truncf %168 : vector<2x128xf32> to vector<2x128xbf16>
    %cst_69 = arith.constant dense<0.000000e+00> : vector<2x512xf32>
    %171 = tpu.matmul %170, %169, %cst_69 {dimension_numbers = #tpu.dot_dimension_numbers<[1], [0], [0], [1], [0, 0, 1, 1], [], []>} : vector<2x128xbf16>, vector<128x512xbf16>, vector<2x512xf32> -> vector<2x512xf32>
    %c12 = arith.constant 12 : index
    %c0_70 = arith.constant 0 : index
    %172 = vector.load %arg2[%c12, %c0_70] : memref<24x512xf32, #tpu.memory_space<vmem>>, vector<1x512xf32>
    %173 = vector.broadcast %172 : vector<1x512xf32> to vector<2x512xf32>
    %174 = arith.addf %171, %173 : vector<2x512xf32>
    %c0_71 = arith.constant 0 : index
    %c0_72 = arith.constant 0 : index
    %175 = vector.load %arg5[%c0_71, %c0_72] : memref<2x512xf32, #tpu.memory_space<vmem>>, vector<2x512xf32>
    tpu.vector_store %arg5[%c0_71, %c0_72], %174 {strides = array<i32>} : memref<2x512xf32, #tpu.memory_space<vmem>>, vector<2x512xf32>,
    return
  }
  func.func @transform_0(%arg0: i32) -> (i32, i32) {
    %c0_i32 = arith.constant 0 : i32
    %c0_i32_0 = arith.constant 0 : i32
    %c0_i32_1 = arith.constant 0 : i32
    return %c0_i32, %c0_i32_0 : i32, i32
  }
  func.func @transform_1(%arg0: i32) -> (i32, i32) {
    %c0_i32 = arith.constant 0 : i32
    %c0_i32_0 = arith.constant 0 : i32
    %c0_i32_1 = arith.constant 0 : i32
    return %c0_i32, %c0_i32_0 : i32, i32
  }
  func.func @transform_2(%arg0: i32) -> (i32, i32) {
    %c0_i32 = arith.constant 0 : i32
    %c0_i32_0 = arith.constant 0 : i32
    %c0_i32_1 = arith.constant 0 : i32
    return %c0_i32, %c0_i32_0 : i32, i32
  }
  func.func @transform_3(%arg0: i32) -> (i32, i32) {
    %c0_i32 = arith.constant 0 : i32
    %c0_i32_0 = arith.constant 0 : i32
    %c0_i32_1 = arith.constant 0 : i32
    return %c0_i32, %c0_i32_0 : i32, i32
  }
  func.func @transform_4(%arg0: i32) -> (i32, i32) {
    %c0_i32 = arith.constant 0 : i32
    %c0_i32_0 = arith.constant 0 : i32
    %c0_i32_1 = arith.constant 0 : i32
    return %c0_i32, %c0_i32_0 : i32, i32
  }
}

</mosaic_0001>

<llo_original>
// kernel: _efficientnet_forward.1
$region0: #{_efficientnet_forward.1}
  #allocation0 [shape = 'u32[]', space=smem, size = 0x4, offset = 0x4, fixed_abs, tag = 'smem constant byte address 0x4 - core index']
  #allocation1 [shape = 'u32[144,128]{1,0:T(1,128)}', space=vmem, size = 0x12000, scoped, tag = 'internal scratch']
  #allocation2 [shape = 'f32[2,10,10,64]{3,2,1,0:T(8,128)}', space=vmem, size = 0x28000, scoped, tag = 'scratch operand']
  %s0 = inlined_call_operand.vmem [shape: f32[128,32], index: 0, kind: input, shape index: {}]
  %s1 = inlined_call_operand.vmem [shape: f32[24,512], index: 1, kind: input, shape index: {}]
  %s2 = inlined_call_operand.vmem [shape: bf16[240,128], index: 2, kind: input, shape index: {}]
  %s3 = inlined_call_operand.vmem [shape: bf16[128,512], index: 3, kind: input, shape index: {}]
  %s4 = inlined_call_operand.hbm [shape: f32[2,512], index: 4, kind: output, shape index: {}]
  %s5 = sld [smem:[#allocation0]]
  $region26: #{_efficientnet_forward.1} parent=0
    _
  %s7 = ssub.s32 1, %s5
  %s8 = scalar_select 0, %s7, %s5
  $region1: #{_efficientnet_forward.1} parent=0
    #allocation3 [shape = 'u8[4096]{0}', space=vmem, size = 0x1000, scoped, tag = 'output window, operand 0, single buffered']
    #allocation4 [shape = 's32[1]{0}', space=sflag, size = 0x4, scoped, tag = 'scoped memory for _efficientnet_forward.1']
    %9 = vsyncpa [#allocation4], 0
    // Predicated region
    $region2: #{_efficientnet_forward.1} parent=1 // pred_check
      _
    $region3: #{_efficientnet_forward.1} parent=1 // pred_check_branch
      %11 = sbr.rel (0) target = $region5
    $region4: #{_efficientnet_forward.1} parent=1 // pred_region
      _
    $region5: #{_efficientnet_forward.1} parent=1 // pred_fallthru
      _
    // Predicated region
    $region6: #{_efficientnet_forward.1} parent=1 // pred_check
      _
    $region7: #{_efficientnet_forward.1} parent=1 // pred_check_branch
      %13 = sbr.rel (0) target = $region9
    $region8: #{_efficientnet_forward.1} parent=1 // pred_region
      _
    $region9: #{_efficientnet_forward.1} parent=1 // pred_fallthru
      _
    // Predicated region
    $region10: #{_efficientnet_forward.1} parent=1 // pred_check
      _
    $region11: #{_efficientnet_forward.1} parent=1 // pred_check_branch
      %15 = sbr.rel (0) target = $region13
    $region12: #{_efficientnet_forward.1} parent=1 // pred_region
      _
    $region13: #{_efficientnet_forward.1} parent=1 // pred_fallthru
      _
    // Predicated region
    $region14: #{_efficientnet_forward.1} parent=1 // pred_check
      _
    $region15: #{_efficientnet_forward.1} parent=1 // pred_check_branch
      %17 = sbr.rel (0) target = $region17
    $region16: #{_efficientnet_forward.1} parent=1 // pred_region
      _
    $region17: #{_efficientnet_forward.1} parent=1 // pred_fallthru
      _
    %v19 = vld [vmem:[%s0] sm:$0xff]
    %v20 = vld [vmem:[%s0 + $0x8] sm:$0xff]
    %v21 = vld [vmem:[%s0 + $0x10] sm:$0xff]
    %v22 = vld [vmem:[%s0 + $0x18] sm:$0xff]
    %v23 = vld [vmem:[%s0 + $0x20] sm:$0xff]
    %v24 = vld [vmem:[%s0 + $0x28] sm:$0xff]
    %v25 = vld [vmem:[%s0 + $0x30] sm:$0xff]
    %v26 = vld [vmem:[%s0 + $0x38] sm:$0xff]
    %v27 = vld [vmem:[%s0 + $0x40] sm:$0xff]
    %v28 = vld [vmem:[%s0 + $0x48] sm:$0xff]
    %v29 = vld [vmem:[%s0 + $0x50] sm:$0xff]
    %v30 = vld [vmem:[%s0 + $0x58] sm:$0xff]
    %v31 = vld [vmem:[%s0 + $0x60] sm:$0xff]
    %v32 = vld [vmem:[%s0 + $0x68] sm:$0xff]
    %v33 = vld [vmem:[%s0 + $0x70] sm:$0xff]
    %v34 = vld [vmem:[%s0 + $0x78] sm:$0xff]
    %v35 = vld [vmem:[%s2] sm:$0xf]
    %v36 = vld [vmem:[%s2 + $0x4] sm:$0xf]
    %v37 = vld [vmem:[%s2 + $0x8] sm:$0xf]
    %v38 = vld [vmem:[%s2 + $0xc] sm:$0xf]
    %v39 = vpack.c.bf16 %v20, %v19
    %v40 = vpack.c.bf16 %v22, %v21
    %v41 = vpack.c.bf16 %v24, %v23
    %v42 = vpack.c.bf16 %v26, %v25
    %v43 = vpack.c.bf16 %v28, %v27
    %v44 = vpack.c.bf16 %v30, %v29
    %v45 = vpack.c.bf16 %v32, %v31
    %v46 = vpack.c.bf16 %v34, %v33
    %v51 = vunpack.c.l.b16 %v35
    %v52 = vunpack.c.l.b16 %v36
    %v53 = vunpack.c.l.b16 %v37
    %v54 = vunpack.c.l.b16 %v38
    %v55 = vpack.c.b16 %v52, %v51
    %v56 = vpack.c.b16 %v54, %v53
    %vm59 = vcmask 261120
    %v61 = vsel %vm59, %v39, 0
    %v64 = vsel %vm59, %v40, 0
    %v67 = vsel %vm59, %v41, 0
    %v70 = vsel %vm59, %v42, 0
    %v73 = vsel %vm59, %v43, 0
    %v76 = vsel %vm59, %v44, 0
    %v79 = vsel %vm59, %v45, 0
    %v82 = vsel %vm59, %v46, 0
    %84 = vmatprep.subr.bf16.mxu0 0
    %85 = vmatpush1.bf16.msra.mxu0 0
    %86 = vmatprep.subr.bf16.mxu0 0
    %87 = vmatpush1.bf16.msra.mxu0 0
    %88 = vmatprep.subr.bf16.mxu0 0
    %89 = vmatpush1.bf16.msra.mxu0 0
    %90 = vmatprep.subr.bf16.mxu0 0
    %91 = vmatpush1.bf16.msra.mxu0 0
    %92 = vmatprep.subr.bf16.mxu0 0
    %93 = vmatpush1.bf16.msra.mxu0 0
    %94 = vmatprep.subr.bf16.mxu0 0
    %95 = vmatpush1.bf16.msra.mxu0 0
    %96 = vmatprep.subr.bf16.mxu0 0
    %97 = vmatpush1.bf16.msra.mxu0 %v56
    %98 = vmatprep.subr.bf16.mxu0 0
    %99 = vmatpush1.bf16.msra.mxu0 %v55
    %100 = vmatprep.subr.bf16.mxu0 0
    %101 = vmatpush2.bf16.msra.mxu0 0
    %102 = vmatprep.subr.bf16.mxu0 0
    %103 = vmatpush2.bf16.msra.mxu0 0
    %104 = vmatprep.subr.bf16.mxu0 0
    %105 = vmatpush2.bf16.msra.mxu0 0
    %106 = vmatprep.subr.bf16.mxu0 0
    %107 = vmatpush2.bf16.msra.mxu0 0
    %108 = vmatprep.subr.bf16.mxu0 0
    %109 = vmatpush2.bf16.msra.mxu0 0
    %110 = vmatprep.subr.bf16.mxu0 0
    %111 = vmatpush2.bf16.msra.mxu0 0
    %112 = vmatprep.subr.bf16.mxu0 0
    %113 = vmatpush2.bf16.msra.mxu0 0
    %114 = vmatprep.subr.bf16.mxu0 0
    %115 = vmatpush2.bf16.msra.mxu0 0
    %116 = vmatprep.mubr.bf16.mxu0 0
    %117 = vmatmul.mubr.bf16.gmra.mxu0 %v61
    %v118 = vpop.f32.mrf.mxu0
    %v119 = vadd.f32 0.0, %v118
    %v120 = vpop.f32.mrf.mxu0
    %v121 = vpop.f32.mrf.mxu0
    %v122 = vadd.f32 0.0, %v121
    %v123 = vpop.f32.mrf.mxu0
    %124 = vmatprep.mubr.bf16.mxu0 0
    %125 = vmatmul.mubr.bf16.gmra.mxu0 %v64
    %v126 = vpop.f32.mrf.mxu0
    %v127 = vadd.f32 0.0, %v126
    %v128 = vpop.f32.mrf.mxu0
    %v129 = vpop.f32.mrf.mxu0
    %v130 = vadd.f32 0.0, %v129
    %v131 = vpop.f32.mrf.mxu0
    %132 = vmatprep.mubr.bf16.mxu0 0
    %133 = vmatmul.mubr.bf16.gmra.mxu0 %v67
    %v134 = vpop.f32.mrf.mxu0
    %v135 = vadd.f32 0.0, %v134
    %v136 = vpop.f32.mrf.mxu0
    %v137 = vpop.f32.mrf.mxu0
    %v138 = vadd.f32 0.0, %v137
    %v139 = vpop.f32.mrf.mxu0
    %140 = vmatprep.mubr.bf16.mxu0 0
    %141 = vmatmul.mubr.bf16.gmra.mxu0 %v70
    %v142 = vpop.f32.mrf.mxu0
    %v143 = vadd.f32 0.0, %v142
    %v144 = vpop.f32.mrf.mxu0
    %v145 = vpop.f32.mrf.mxu0
    %v146 = vadd.f32 0.0, %v145
    %v147 = vpop.f32.mrf.mxu0
    %148 = vmatprep.mubr.bf16.mxu0 0
    %149 = vmatmul.mubr.bf16.gmra.mxu0 %v73
    %v150 = vpop.f32.mrf.mxu0
    %v151 = vadd.f32 0.0, %v150
    %v152 = vpop.f32.mrf.mxu0
    %v153 = vpop.f32.mrf.mxu0
    %v154 = vadd.f32 0.0, %v153
    %v155 = vpop.f32.mrf.mxu0
    %156 = vmatprep.mubr.bf16.mxu0 0
    %157 = vmatmul.mubr.bf16.gmra.mxu0 %v76
    %v158 = vpop.f32.mrf.mxu0
    %v159 = vadd.f32 0.0, %v158
    %v160 = vpop.f32.mrf.mxu0
    %v161 = vpop.f32.mrf.mxu0
    %v162 = vadd.f32 0.0, %v161
    %v163 = vpop.f32.mrf.mxu0
    %164 = vmatprep.mubr.bf16.mxu0 0
    %165 = vmatmul.mubr.bf16.gmra.mxu0 %v79
    %v166 = vpop.f32.mrf.mxu0
    %v167 = vadd.f32 0.0, %v166
    %v168 = vpop.f32.mrf.mxu0
    %v169 = vpop.f32.mrf.mxu0
    %v170 = vadd.f32 0.0, %v169
    %v171 = vpop.f32.mrf.mxu0
    %172 = vmatprep.mubr.bf16.mxu0 0
    %173 = vmatmul.mubr.bf16.gmra.mxu0 %v82
    %v174 = vpop.f32.mrf.mxu0
    %v175 = vadd.f32 0.0, %v174
    %v176 = vpop.f32.mrf.mxu0
    %v177 = vpop.f32.mrf.mxu0
    %v178 = vadd.f32 0.0, %v177
    %v179 = vpop.f32.mrf.mxu0
    %180 = vdwg.mxu0
    %v181 = vld [vmem:[%s1] ss:$0 sm:$0xff]
    %v182 = vmul.f32 %v119, %v181
    %v183 = vmul.f32 %v122, %v181
    %v184 = vmul.f32 %v127, %v181
    %v185 = vmul.f32 %v130, %v181
    %v186 = vmul.f32 %v135, %v181
    %v187 = vmul.f32 %v138, %v181
    %v188 = vmul.f32 %v143, %v181
    %v189 = vmul.f32 %v146, %v181
    %v190 = vmul.f32 %v151, %v181
    %v191 = vmul.f32 %v154, %v181
    %v192 = vmul.f32 %v159, %v181
    %v193 = vmul.f32 %v162, %v181
    %v194 = vmul.f32 %v167, %v181
    %v195 = vmul.f32 %v170, %v181
    %v196 = vmul.f32 %v175, %v181
    %v197 = vmul.f32 %v178, %v181
    %v198 = vld [vmem:[%s1 + $0x1] ss:$0 sm:$0xff]
    %v199 = vadd.f32 %v182, %v198
    %v200 = vadd.f32 %v183, %v198
    %v201 = vadd.f32 %v184, %v198
    %v202 = vadd.f32 %v185, %v198
    %v203 = vadd.f32 %v186, %v198
    %v204 = vadd.f32 %v187, %v198
    %v205 = vadd.f32 %v188, %v198
    %v206 = vadd.f32 %v189, %v198
    %v207 = vadd.f32 %v190, %v198
    %v208 = vadd.f32 %v191, %v198
    %v209 = vadd.f32 %v192, %v198
    %v210 = vadd.f32 %v193, %v198
    %v211 = vadd.f32 %v194, %v198
    %v212 = vadd.f32 %v195, %v198
    %v213 = vadd.f32 %v196, %v198
    %v214 = vadd.f32 %v197, %v198
    %v215 = vxor.u32 %v199, 2147483648
    %v216 = vxor.u32 %v200, 2147483648
    %v217 = vxor.u32 %v201, 2147483648
    %v218 = vxor.u32 %v202, 2147483648
    %v219 = vxor.u32 %v203, 2147483648
    %v220 = vxor.u32 %v204, 2147483648
    %v221 = vxor.u32 %v205, 2147483648
    %v222 = vxor.u32 %v206, 2147483648
    %v223 = vxor.u32 %v207, 2147483648
    %v224 = vxor.u32 %v208, 2147483648
    %v225 = vxor.u32 %v209, 2147483648
    %v226 = vxor.u32 %v210, 2147483648
    %v227 = vxor.u32 %v211, 2147483648
    %v228 = vxor.u32 %v212, 2147483648
    %v229 = vxor.u32 %v213, 2147483648
    %v230 = vxor.u32 %v214, 2147483648
    %v231 = vmul.f32 %v215, 1.442695
    %v232 = vpow.pop %v231
    %v233 = vmul.f32 %v216, 1.442695
    %v234 = vpow.pop %v233
    %v235 = vmul.f32 %v217, 1.442695
    %v236 = vpow.pop %v235
    %v237 = vmul.f32 %v218, 1.442695
    %v238 = vpow.pop %v237
    %v239 = vmul.f32 %v219, 1.442695
    %v240 = vpow.pop %v239
    %v241 = vmul.f32 %v220, 1.442695
    %v242 = vpow.pop %v241
    %v243 = vmul.f32 %v221, 1.442695
    %v244 = vpow.pop %v243
    %v245 = vmul.f32 %v222, 1.442695
    %v246 = vpow.pop %v245
    %v247 = vmul.f32 %v223, 1.442695
    %v248 = vpow.pop %v247
    %v249 = vmul.f32 %v224, 1.442695
    %v250 = vpow.pop %v249
    %v251 = vmul.f32 %v225, 1.442695
    %v252 = vpow.pop %v251
    %v253 = vmul.f32 %v226, 1.442695
    %v254 = vpow.pop %v253
    %v255 = vmul.f32 %v227, 1.442695
    %v256 = vpow.pop %v255
    %v257 = vmul.f32 %v228, 1.442695
    %v258 = vpow.pop %v257
    %v259 = vmul.f32 %v229, 1.442695
    %v260 = vpow.pop %v259
    %v261 = vmul.f32 %v230, 1.442695
    %v262 = vpow.pop %v261
    %v263 = vadd.f32 %v232, 1.0
    %v264 = vadd.f32 %v234, 1.0
    %v265 = vadd.f32 %v236, 1.0
    %v266 = vadd.f32 %v238, 1.0
    %v267 = vadd.f32 %v240, 1.0
    %v268 = vadd.f32 %v242, 1.0
    %v269 = vadd.f32 %v244, 1.0
    %v270 = vadd.f32 %v246, 1.0
    %v271 = vadd.f32 %v248, 1.0
    %v272 = vadd.f32 %v250, 1.0
    %v273 = vadd.f32 %v252, 1.0
    %v274 = vadd.f32 %v254, 1.0
    %v275 = vadd.f32 %v256, 1.0
    %v276 = vadd.f32 %v258, 1.0
    %v277 = vadd.f32 %v260, 1.0
    %v278 = vadd.f32 %v262, 1.0
    %v279 = vrcp.pop %v263
    %v280 = vmul.f32 1.0, %v279
    %v281 = vrcp.pop %v264
    %v282 = vmul.f32 1.0, %v281
    %v283 = vrcp.pop %v265
    %v284 = vmul.f32 1.0, %v283
    %v285 = vrcp.pop %v266
    %v286 = vmul.f32 1.0, %v285
    %v287 = vrcp.pop %v267
    %v288 = vmul.f32 1.0, %v287
    %v289 = vrcp.pop %v268
    %v290 = vmul.f32 1.0, %v289
    %v291 = vrcp.pop %v269
    %v292 = vmul.f32 1.0, %v291
    %v293 = vrcp.pop %v270
    %v294 = vmul.f32 1.0, %v293
    %v295 = vrcp.pop %v271
    %v296 = vmul.f32 1.0, %v295
    %v297 = vrcp.pop %v272
    %v298 = vmul.f32 1.0, %v297
    %v299 = vrcp.pop %v273
    %v300 = vmul.f32 1.0, %v299
    %v301 = vrcp.pop %v274
    %v302 = vmul.f32 1.0, %v301
    %v303 = vrcp.pop %v275
    %v304 = vmul.f32 1.0, %v303
    %v305 = vrcp.pop %v276
    %v306 = vmul.f32 1.0, %v305
    %v307 = vrcp.pop %v277
    %v308 = vmul.f32 1.0, %v307
    %v309 = vrcp.pop %v278
    %v310 = vmul.f32 1.0, %v309
    %v311 = vmul.f32 %v199, %v280
    %v312 = vmul.f32 %v200, %v282
    %v313 = vmul.f32 %v201, %v284
    %v314 = vmul.f32 %v202, %v286
    %v315 = vmul.f32 %v203, %v288
    %v316 = vmul.f32 %v204, %v290
    %v317 = vmul.f32 %v205, %v292
    %v318 = vmul.f32 %v206, %v294
    %v319 = vmul.f32 %v207, %v296
    %v320 = vmul.f32 %v208, %v298
    %v321 = vmul.f32 %v209, %v300
    %v322 = vmul.f32 %v210, %v302
    %v323 = vmul.f32 %v211, %v304
    %v324 = vmul.f32 %v212, %v306
    %v325 = vmul.f32 %v213, %v308
    %v326 = vmul.f32 %v214, %v310
    %v327 = vld [vmem:[%s2 + $0x10] sm:$0xf]
    %v328 = vld [vmem:[%s2 + $0x14] sm:$0xf]
    %v329 = vld [vmem:[%s2 + $0x18] sm:$0xf]
    %v330 = vld [vmem:[%s2 + $0x1c] sm:$0xf]
    %v331 = vpack.c.bf16 %v312, %v311
    %v332 = vpack.c.bf16 %v314, %v313
    %v333 = vpack.c.bf16 %v316, %v315
    %v334 = vpack.c.bf16 %v318, %v317
    %v335 = vpack.c.bf16 %v320, %v319
    %v336 = vpack.c.bf16 %v322, %v321
    %v337 = vpack.c.bf16 %v324, %v323
    %v338 = vpack.c.bf16 %v326, %v325
    %v343 = vunpack.c.l.b16 %v327
    %v344 = vunpack.c.l.b16 %v328
    %v345 = vunpack.c.l.b16 %v329
    %v346 = vunpack.c.l.b16 %v330
    %v347 = vpack.c.b16 %v344, %v343
    %v348 = vpack.c.b16 %v346, %v345
    %v352 = vsel %vm59, %v331, 0
    %v355 = vsel %vm59, %v332, 0
    %v358 = vsel %vm59, %v333, 0
    %v361 = vsel %vm59, %v334, 0
    %v364 = vsel %vm59, %v335, 0
    %v367 = vsel %vm59, %v336, 0
    %v370 = vsel %vm59, %v337, 0
    %v373 = vsel %vm59, %v338, 0
    %375 = vmatprep.subr.bf16.mxu0 0
    %376 = vmatpush1.bf16.msra.mxu0 0
    %377 = vmatprep.subr.bf16.mxu0 0
    %378 = vmatpush1.bf16.msra.mxu0 0
    %379 = vmatprep.subr.bf16.mxu0 0
    %380 = vmatpush1.bf16.msra.mxu0 0
    %381 = vmatprep.subr.bf16.mxu0 0
    %382 = vmatpush1.bf16.msra.mxu0 0
    %383 = vmatprep.subr.bf16.mxu0 0
    %384 = vmatpush1.bf16.msra.mxu0 0
    %385 = vmatprep.subr.bf16.mxu0 0
    %386 = vmatpush1.bf16.msra.mxu0 0
    %387 = vmatprep.subr.bf16.mxu0 0
    %388 = vmatpush1.bf16.msra.mxu0 %v348
    %389 = vmatprep.subr.bf16.mxu0 0
    %390 = vmatpush1.bf16.msra.mxu0 %v347
    %391 = vmatprep.subr.bf16.mxu0 0
    %392 = vmatpush2.bf16.msra.mxu0 0
    %393 = vmatprep.subr.bf16.mxu0 0
    %394 = vmatpush2.bf16.msra.mxu0 0
    %395 = vmatprep.subr.bf16.mxu0 0
    %396 = vmatpush2.bf16.msra.mxu0 0
    %397 = vmatprep.subr.bf16.mxu0 0
    %398 = vmatpush2.bf16.msra.mxu0 0
    %399 = vmatprep.subr.bf16.mxu0 0
    %400 = vmatpush2.bf16.msra.mxu0 0
    %401 = vmatprep.subr.bf16.mxu0 0
    %402 = vmatpush2.bf16.msra.mxu0 0
    %403 = vmatprep.subr.bf16.mxu0 0
    %404 = vmatpush2.bf16.msra.mxu0 0
    %405 = vmatprep.subr.bf16.mxu0 0
    %406 = vmatpush2.bf16.msra.mxu0 0
    %407 = vmatprep.mubr.bf16.mxu0 0
    %408 = vmatmul.mubr.bf16.gmra.mxu0 %v352
    %v409 = vpop.f32.mrf.mxu0
    %v410 = vadd.f32 0.0, %v409
    %v411 = vpop.f32.mrf.mxu0
    %v412 = vpop.f32.mrf.mxu0
    %v413 = vadd.f32 0.0, %v412
    %v414 = vpop.f32.mrf.mxu0
    %415 = vmatprep.mubr.bf16.mxu0 0
    %416 = vmatmul.mubr.bf16.gmra.mxu0 %v355
    %v417 = vpop.f32.mrf.mxu0
    %v418 = vadd.f32 0.0, %v417
    %v419 = vpop.f32.mrf.mxu0
    %v420 = vpop.f32.mrf.mxu0
    %v421 = vadd.f32 0.0, %v420
    %v422 = vpop.f32.mrf.mxu0
    %423 = vmatprep.mubr.bf16.mxu0 0
    %424 = vmatmul.mubr.bf16.gmra.mxu0 %v358
    %v425 = vpop.f32.mrf.mxu0
    %v426 = vadd.f32 0.0, %v425
    %v427 = vpop.f32.mrf.mxu0
    %v428 = vpop.f32.mrf.mxu0
    %v429 = vadd.f32 0.0, %v428
    %v430 = vpop.f32.mrf.mxu0
    %431 = vmatprep.mubr.bf16.mxu0 0
    %432 = vmatmul.mubr.bf16.gmra.mxu0 %v361
    %v433 = vpop.f32.mrf.mxu0
    %v434 = vadd.f32 0.0, %v433
    %v435 = vpop.f32.mrf.mxu0
    %v436 = vpop.f32.mrf.mxu0
    %v437 = vadd.f32 0.0, %v436
    %v438 = vpop.f32.mrf.mxu0
    %439 = vmatprep.mubr.bf16.mxu0 0
    %440 = vmatmul.mubr.bf16.gmra.mxu0 %v364
    %v441 = vpop.f32.mrf.mxu0
    %v442 = vadd.f32 0.0, %v441
    %v443 = vpop.f32.mrf.mxu0
    %v444 = vpop.f32.mrf.mxu0
    %v445 = vadd.f32 0.0, %v444
    %v446 = vpop.f32.mrf.mxu0
    %447 = vmatprep.mubr.bf16.mxu0 0
    %448 = vmatmul.mubr.bf16.gmra.mxu0 %v367
    %v449 = vpop.f32.mrf.mxu0
    %v450 = vadd.f32 0.0, %v449
    %v451 = vpop.f32.mrf.mxu0
    %v452 = vpop.f32.mrf.mxu0
    %v453 = vadd.f32 0.0, %v452
    %v454 = vpop.f32.mrf.mxu0
    %455 = vmatprep.mubr.bf16.mxu0 0
    %456 = vmatmul.mubr.bf16.gmra.mxu0 %v370
    %v457 = vpop.f32.mrf.mxu0
    %v458 = vadd.f32 0.0, %v457
    %v459 = vpop.f32.mrf.mxu0
    %v460 = vpop.f32.mrf.mxu0
    %v461 = vadd.f32 0.0, %v460
    %v462 = vpop.f32.mrf.mxu0
    %463 = vmatprep.mubr.bf16.mxu0 0
    %464 = vmatmul.mubr.bf16.gmra.mxu0 %v373
    %v465 = vpop.f32.mrf.mxu0
    %v466 = vadd.f32 0.0, %v465
    %v467 = vpop.f32.mrf.mxu0
    %v468 = vpop.f32.mrf.mxu0
    %v469 = vadd.f32 0.0, %v468
    %v470 = vpop.f32.mrf.mxu0
    %471 = vdwg.mxu0
    %v472 = vld [vmem:[%s1 + $0x2] ss:$0 sm:$0xff]
    %v473 = vmul.f32 %v410, %v472
    %v474 = vmul.f32 %v413, %v472
    %v475 = vmul.f32 %v418, %v472
    %v476 = vmul.f32 %v421, %v472
    %v477 = vmul.f32 %v426, %v472
    %v478 = vmul.f32 %v429, %v472
    %v479 = vmul.f32 %v434, %v472
    %v480 = vmul.f32 %v437, %v472
    %v481 = vmul.f32 %v442, %v472
    %v482 = vmul.f32 %v445, %v472
    %v483 = vmul.f32 %v450, %v472
    %v484 = vmul.f32 %v453, %v472
    %v485 = vmul.f32 %v458, %v472
    %v486 = vmul.f32 %v461, %v472
    %v487 = vmul.f32 %v466, %v472
    %v488 = vmul.f32 %v469, %v472
    %v489 = vld [vmem:[%s1 + $0x3] ss:$0 sm:$0xff]
    %v490 = vadd.f32 %v473, %v489
    %v491 = vadd.f32 %v474, %v489
    %v492 = vadd.f32 %v475, %v489
    %v493 = vadd.f32 %v476, %v489
    %v494 = vadd.f32 %v477, %v489
    %v495 = vadd.f32 %v478, %v489
    %v496 = vadd.f32 %v479, %v489
    %v497 = vadd.f32 %v480, %v489
    %v498 = vadd.f32 %v481, %v489
    %v499 = vadd.f32 %v482, %v489
    %v500 = vadd.f32 %v483, %v489
    %v501 = vadd.f32 %v484, %v489
    %v502 = vadd.f32 %v485, %v489
    %v503 = vadd.f32 %v486, %v489
    %v504 = vadd.f32 %v487, %v489
    %v505 = vadd.f32 %v488, %v489
    %v506 = vxor.u32 %v490, 2147483648
    %v507 = vxor.u32 %v491, 2147483648
    %v508 = vxor.u32 %v492, 2147483648
    %v509 = vxor.u32 %v493, 2147483648
    %v510 = vxor.u32 %v494, 2147483648
    %v511 = vxor.u32 %v495, 2147483648
    %v512 = vxor.u32 %v496, 2147483648
    %v513 = vxor.u32 %v497, 2147483648
    %v514 = vxor.u32 %v498, 2147483648
    %v515 = vxor.u32 %v499, 2147483648
    %v516 = vxor.u32 %v500, 2147483648
    %v517 = vxor.u32 %v501, 2147483648
    %v518 = vxor.u32 %v502, 2147483648
    %v519 = vxor.u32 %v503, 2147483648
    %v520 = vxor.u32 %v504, 2147483648
    %v521 = vxor.u32 %v505, 2147483648
    %v522 = vmul.f32 %v506, 1.442695
    %v523 = vpow.pop %v522
    %v524 = vmul.f32 %v507, 1.442695
    %v525 = vpow.pop %v524
    %v526 = vmul.f32 %v508, 1.442695
    %v527 = vpow.pop %v526
    %v528 = vmul.f32 %v509, 1.442695
    %v529 = vpow.pop %v528
    %v530 = vmul.f32 %v510, 1.442695
    %v531 = vpow.pop %v530
    %v532 = vmul.f32 %v511, 1.442695
    %v533 = vpow.pop %v532
    %v534 = vmul.f32 %v512, 1.442695
    %v535 = vpow.pop %v534
    %v536 = vmul.f32 %v513, 1.442695
    %v537 = vpow.pop %v536
    %v538 = vmul.f32 %v514, 1.442695
    %v539 = vpow.pop %v538
    %v540 = vmul.f32 %v515, 1.442695
    %v541 = vpow.pop %v540
    %v542 = vmul.f32 %v516, 1.442695
    %v543 = vpow.pop %v542
    %v544 = vmul.f32 %v517, 1.442695
    %v545 = vpow.pop %v544
    %v546 = vmul.f32 %v518, 1.442695
    %v547 = vpow.pop %v546
    %v548 = vmul.f32 %v519, 1.442695
    %v549 = vpow.pop %v548
    %v550 = vmul.f32 %v520, 1.442695
    %v551 = vpow.pop %v550
    %v552 = vmul.f32 %v521, 1.442695
    %v553 = vpow.pop %v552
    %v554 = vadd.f32 %v523, 1.0
    %v555 = vadd.f32 %v525, 1.0
    %v556 = vadd.f32 %v527, 1.0
    %v557 = vadd.f32 %v529, 1.0
    %v558 = vadd.f32 %v531, 1.0
    %v559 = vadd.f32 %v533, 1.0
    %v560 = vadd.f32 %v535, 1.0
    %v561 = vadd.f32 %v537, 1.0
    %v562 = vadd.f32 %v539, 1.0
    %v563 = vadd.f32 %v541, 1.0
    %v564 = vadd.f32 %v543, 1.0
    %v565 = vadd.f32 %v545, 1.0
    %v566 = vadd.f32 %v547, 1.0
    %v567 = vadd.f32 %v549, 1.0
    %v568 = vadd.f32 %v551, 1.0
    %v569 = vadd.f32 %v553, 1.0
    %v570 = vrcp.pop %v554
    %v571 = vmul.f32 1.0, %v570
    %v572 = vrcp.pop %v555
    %v573 = vmul.f32 1.0, %v572
    %v574 = vrcp.pop %v556
    %v575 = vmul.f32 1.0, %v574
    %v576 = vrcp.pop %v557
    %v577 = vmul.f32 1.0, %v576
    %v578 = vrcp.pop %v558
    %v579 = vmul.f32 1.0, %v578
    %v580 = vrcp.pop %v559
    %v581 = vmul.f32 1.0, %v580
    %v582 = vrcp.pop %v560
    %v583 = vmul.f32 1.0, %v582
    %v584 = vrcp.pop %v561
    %v585 = vmul.f32 1.0, %v584
    %v586 = vrcp.pop %v562
    %v587 = vmul.f32 1.0, %v586
    %v588 = vrcp.pop %v563
    %v589 = vmul.f32 1.0, %v588
    %v590 = vrcp.pop %v564
    %v591 = vmul.f32 1.0, %v590
    %v592 = vrcp.pop %v565
    %v593 = vmul.f32 1.0, %v592
    %v594 = vrcp.pop %v566
    %v595 = vmul.f32 1.0, %v594
    %v596 = vrcp.pop %v567
    %v597 = vmul.f32 1.0, %v596
    %v598 = vrcp.pop %v568
    %v599 = vmul.f32 1.0, %v598
    %v600 = vrcp.pop %v569
    %v601 = vmul.f32 1.0, %v600
    %v602 = vmul.f32 %v490, %v571
    %v603 = vmul.f32 %v491, %v573
    %v604 = vmul.f32 %v492, %v575
    %v605 = vmul.f32 %v493, %v577
    %v606 = vmul.f32 %v494, %v579
    %v607 = vmul.f32 %v495, %v581
    %v608 = vmul.f32 %v496, %v583
    %v609 = vmul.f32 %v497, %v585
    %v610 = vmul.f32 %v498, %v587
    %v611 = vmul.f32 %v499, %v589
    %v612 = vmul.f32 %v500, %v591
    %v613 = vmul.f32 %v501, %v593
    %v614 = vmul.f32 %v502, %v595
    %v615 = vmul.f32 %v503, %v597
    %v616 = vmul.f32 %v504, %v599
    %v617 = vmul.f32 %v505, %v601
    %vm618 = vcmask 523264
    %619 = vst.msk [vmem:[#allocation2] sm:$0xff] %vm618, 0.0
    %vm620 = vcmask 517120
    %621 = vst.msk [vmem:[#allocation2 + $0x8] sm:$0x3] %vm620, 0.0
    %622 = vst.msk [vmem:[#allocation2 + $0x10] sm:$0xff] %vm618, 0.0
    %623 = vst.msk [vmem:[#allocation2 + $0x18] sm:$0x3] %vm620, 0.0
    %624 = vst.msk [vmem:[#allocation2 + $0x20] sm:$0xff] %vm618, 0.0
    %625 = vst.msk [vmem:[#allocation2 + $0x28] sm:$0x3] %vm620, 0.0
    %626 = vst.msk [vmem:[#allocation2 + $0x30] sm:$0xff] %vm618, 0.0
    %627 = vst.msk [vmem:[#allocation2 + $0x38] sm:$0x3] %vm620, 0.0
    %628 = vst.msk [vmem:[#allocation2 + $0x40] sm:$0xff] %vm618, 0.0
    %629 = vst.msk [vmem:[#allocation2 + $0x48] sm:$0x3] %vm620, 0.0
    %630 = vst.msk [vmem:[#allocation2 + $0x50] sm:$0xff] %vm618, 0.0
    %631 = vst.msk [vmem:[#allocation2 + $0x58] sm:$0x3] %vm620, 0.0
    %632 = vst.msk [vmem:[#allocation2 + $0x60] sm:$0xff] %vm618, 0.0
    %633 = vst.msk [vmem:[#allocation2 + $0x68] sm:$0x3] %vm620, 0.0
    %634 = vst.msk [vmem:[#allocation2 + $0x70] sm:$0xff] %vm618, 0.0
    %635 = vst.msk [vmem:[#allocation2 + $0x78] sm:$0x3] %vm620, 0.0
    %636 = vst.msk [vmem:[#allocation2 + $0x80] sm:$0xff] %vm618, 0.0
    %637 = vst.msk [vmem:[#allocation2 + $0x88] sm:$0x3] %vm620, 0.0
    %638 = vst.msk [vmem:[#allocation2 + $0x90] sm:$0xff] %vm618, 0.0
    %639 = vst.msk [vmem:[#allocation2 + $0x98] sm:$0x3] %vm620, 0.0
    %640 = vst.msk [vmem:[#allocation2 + $0xa0] sm:$0xff] %vm618, 0.0
    %641 = vst.msk [vmem:[#allocation2 + $0xa8] sm:$0x3] %vm620, 0.0
    %642 = vst.msk [vmem:[#allocation2 + $0xb0] sm:$0xff] %vm618, 0.0
    %643 = vst.msk [vmem:[#allocation2 + $0xb8] sm:$0x3] %vm620, 0.0
    %644 = vst.msk [vmem:[#allocation2 + $0xc0] sm:$0xff] %vm618, 0.0
    %645 = vst.msk [vmem:[#allocation2 + $0xc8] sm:$0x3] %vm620, 0.0
    %646 = vst.msk [vmem:[#allocation2 + $0xd0] sm:$0xff] %vm618, 0.0
    %647 = vst.msk [vmem:[#allocation2 + $0xd8] sm:$0x3] %vm620, 0.0
    %648 = vst.msk [vmem:[#allocation2 + $0xe0] sm:$0xff] %vm618, 0.0
    %649 = vst.msk [vmem:[#allocation2 + $0xe8] sm:$0x3] %vm620, 0.0
    %650 = vst.msk [vmem:[#allocation2 + $0xf0] sm:$0xff] %vm618, 0.0
    %651 = vst.msk [vmem:[#allocation2 + $0xf8] sm:$0x3] %vm620, 0.0
    %652 = vst.msk [vmem:[#allocation2 + $0x100] sm:$0xff] %vm618, 0.0
    %653 = vst.msk [vmem:[#allocation2 + $0x108] sm:$0x3] %vm620, 0.0
    %654 = vst.msk [vmem:[#allocation2 + $0x110] sm:$0xff] %vm618, 0.0
    %655 = vst.msk [vmem:[#allocation2 + $0x118] sm:$0x3] %vm620, 0.0
    %656 = vst.msk [vmem:[#allocation2 + $0x120] sm:$0xff] %vm618, 0.0
    %657 = vst.msk [vmem:[#allocation2 + $0x128] sm:$0x3] %vm620, 0.0
    %658 = vst.msk [vmem:[#allocation2 + $0x130] sm:$0xff] %vm618, 0.0
    %659 = vst.msk [vmem:[#allocation2 + $0x138] sm:$0x3] %vm620, 0.0
    %s660 = scalar_lea.vmem [#allocation2], 16
    %661 = vst.msk [vmem:[%s660 + $0x1] sm:$0xff] %vm618, %v602
    %662 = vst.msk [vmem:[%s660 + $0x11] sm:$0xff] %vm618, %v603
    %663 = vst.msk [vmem:[%s660 + $0x21] sm:$0xff] %vm618, %v604
    %664 = vst.msk [vmem:[%s660 + $0x31] sm:$0xff] %vm618, %v605
    %665 = vst.msk [vmem:[%s660 + $0x41] sm:$0xff] %vm618, %v606
    %666 = vst.msk [vmem:[%s660 + $0x51] sm:$0xff] %vm618, %v607
    %667 = vst.msk [vmem:[%s660 + $0x61] sm:$0xff] %vm618, %v608
    %668 = vst.msk [vmem:[%s660 + $0x71] sm:$0xff] %vm618, %v609
    %669 = vst.msk [vmem:[%s660 + $0xa1] sm:$0xff] %vm618, %v610
    %670 = vst.msk [vmem:[%s660 + $0xb1] sm:$0xff] %vm618, %v611
    %671 = vst.msk [vmem:[%s660 + $0xc1] sm:$0xff] %vm618, %v612
    %672 = vst.msk [vmem:[%s660 + $0xd1] sm:$0xff] %vm618, %v613
    %673 = vst.msk [vmem:[%s660 + $0xe1] sm:$0xff] %vm618, %v614
    %674 = vst.msk [vmem:[%s660 + $0xf1] sm:$0xff] %vm618, %v615
    %675 = vst.msk [vmem:[%s660 + $0x101] sm:$0xff] %vm618, %v616
    %676 = vst.msk [vmem:[%s660 + $0x111] sm:$0xff] %vm618, %v617
    %v677 = vld [vmem:[#allocation2] sm:$0xff]
    %v678 = vld [vmem:[#allocation2 + $0x8] sm:$0x3]
    %v679 = vld [vmem:[#allocation2 + $0x10] sm:$0xff]
    %v680 = vld [vmem:[#allocation2 + $0x18] sm:$0x3]
    %v681 = vld [vmem:[#allocation2 + $0x20] sm:$0xff]
    %v682 = vld [vmem:[#allocation2 + $0x28] sm:$0x3]
    %v683 = vld [vmem:[#allocation2 + $0x30] sm:$0xff]
    %v684 = vld [vmem:[#allocation2 + $0x38] sm:$0x3]
    %v685 = vld [vmem:[#allocation2 + $0x40] sm:$0xff]
    %v686 = vld [vmem:[#allocation2 + $0x48] sm:$0x3]
    %v687 = vld [vmem:[#allocation2 + $0x50] sm:$0xff]
    %v688 = vld [vmem:[#allocation2 + $0x58] sm:$0x3]
    %v689 = vld [vmem:[#allocation2 + $0x60] sm:$0xff]
    %v690 = vld [vmem:[#allocation2 + $0x68] sm:$0x3]
    %v691 = vld [vmem:[#allocation2 + $0x70] sm:$0xff]
    %v692 = vld [vmem:[#allocation2 + $0x78] sm:$0x3]
    %v693 = vld [vmem:[#allocation2 + $0xa0] sm:$0xff]
    %v694 = vld [vmem:[#allocation2 + $0xa8] sm:$0x3]
    %v695 = vld [vmem:[#allocation2 + $0xb0] sm:$0xff]
    %v696 = vld [vmem:[#allocation2 + $0xb8] sm:$0x3]
    %v697 = vld [vmem:[#allocation2 + $0xc0] sm:$0xff]
    %v698 = vld [vmem:[#allocation2 + $0xc8] sm:$0x3]
    %v699 = vld [vmem:[#allocation2 + $0xd0] sm:$0xff]
    %v700 = vld [vmem:[#allocation2 + $0xd8] sm:$0x3]
    %v701 = vld [vmem:[#allocation2 + $0xe0] sm:$0xff]
    %v702 = vld [vmem:[#allocation2 + $0xe8] sm:$0x3]
    %v703 = vld [vmem:[#allocation2 + $0xf0] sm:$0xff]
    %v704 = vld [vmem:[#allocation2 + $0xf8] sm:$0x3]
    %v705 = vld [vmem:[#allocation2 + $0x100] sm:$0xff]
    %v706 = vld [vmem:[#allocation2 + $0x108] sm:$0x3]
    %v707 = vld [vmem:[#allocation2 + $0x110] sm:$0xff]
    %v708 = vld [vmem:[#allocation2 + $0x118] sm:$0x3]
    %v709 = vld [vmem:[%s1 + $0x25] ss:$0 sm:$0xff]
    %v710 = vmul.f32 %v677, %v709
    %v711 = vmul.f32 %v679, %v709
    %v712 = vmul.f32 %v681, %v709
    %v713 = vmul.f32 %v683, %v709
    %v714 = vmul.f32 %v685, %v709
    %v715 = vmul.f32 %v687, %v709
    %v716 = vmul.f32 %v689, %v709
    %v717 = vmul.f32 %v691, %v709
    %v718 = vmul.f32 %v693, %v709
    %v719 = vmul.f32 %v695, %v709
    %v720 = vmul.f32 %v697, %v709
    %v721 = vmul.f32 %v699, %v709
    %v722 = vmul.f32 %v701, %v709
    %v723 = vmul.f32 %v703, %v709
    %v724 = vmul.f32 %v705, %v709
    %v725 = vmul.f32 %v707, %v709
    %v726 = vadd.f32 %v710, 0.0
    %v727 = vadd.f32 %v711, 0.0
    %v728 = vadd.f32 %v712, 0.0
    %v729 = vadd.f32 %v713, 0.0
    %v730 = vadd.f32 %v714, 0.0
    %v731 = vadd.f32 %v715, 0.0
    %v732 = vadd.f32 %v716, 0.0
    %v733 = vadd.f32 %v717, 0.0
    %v734 = vadd.f32 %v718, 0.0
    %v735 = vadd.f32 %v719, 0.0
    %v736 = vadd.f32 %v720, 0.0
    %v737 = vadd.f32 %v721, 0.0
    %v738 = vadd.f32 %v722, 0.0
    %v739 = vadd.f32 %v723, 0.0
    %v740 = vadd.f32 %v724, 0.0
    %v741 = vadd.f32 %v725, 0.0
    %v742 = vld [vmem:[%s1 + $0x26] ss:$0 sm:$0xff]
    %v743 = vmul.f32 %v677, %v742
    %v744 = vmul.f32 %v678, %v742
    %v745 = vmul.f32 %v679, %v742
    %v746 = vmul.f32 %v680, %v742
    %v747 = vmul.f32 %v681, %v742
    %v748 = vmul.f32 %v682, %v742
    %v749 = vmul.f32 %v683, %v742
    %v750 = vmul.f32 %v684, %v742
    %v751 = vmul.f32 %v685, %v742
    %v752 = vmul.f32 %v686, %v742
    %v753 = vmul.f32 %v687, %v742
    %v754 = vmul.f32 %v688, %v742
    %v755 = vmul.f32 %v689, %v742
    %v756 = vmul.f32 %v690, %v742
    %v757 = vmul.f32 %v691, %v742
    %v758 = vmul.f32 %v692, %v742
    %v759 = vmul.f32 %v693, %v742
    %v760 = vmul.f32 %v694, %v742
    %v761 = vmul.f32 %v695, %v742
    %v762 = vmul.f32 %v696, %v742
    %v763 = vmul.f32 %v697, %v742
    %v764 = vmul.f32 %v698, %v742
    %v765 = vmul.f32 %v699, %v742
    %v766 = vmul.f32 %v700, %v742
    %v767 = vmul.f32 %v701, %v742
    %v768 = vmul.f32 %v702, %v742
    %v769 = vmul.f32 %v703, %v742
    %v770 = vmul.f32 %v704, %v742
    %v771 = vmul.f32 %v705, %v742
    %v772 = vmul.f32 %v706, %v742
    %v773 = vmul.f32 %v707, %v742
    %v774 = vmul.f32 %v708, %v742
    %vm807 = vcmask 1046528
    %v808 = vrot.slane %v743, 1
    %v809 = vrot.slane %v744, 1
    %v810 = vsel %vm807, %v808, %v809
    %v811 = vrot.slane %v745, 1
    %v812 = vrot.slane %v746, 1
    %v813 = vsel %vm807, %v811, %v812
    %v814 = vrot.slane %v747, 1
    %v815 = vrot.slane %v748, 1
    %v816 = vsel %vm807, %v814, %v815
    %v817 = vrot.slane %v749, 1
    %v818 = vrot.slane %v750, 1
    %v819 = vsel %vm807, %v817, %v818
    %v820 = vrot.slane %v751, 1
    %v821 = vrot.slane %v752, 1
    %v822 = vsel %vm807, %v820, %v821
    %v823 = vrot.slane %v753, 1
    %v824 = vrot.slane %v754, 1
    %v825 = vsel %vm807, %v823, %v824
    %v826 = vrot.slane %v755, 1
    %v827 = vrot.slane %v756, 1
    %v828 = vsel %vm807, %v826, %v827
    %v829 = vrot.slane %v757, 1
    %v830 = vrot.slane %v758, 1
    %v831 = vsel %vm807, %v829, %v830
    %v832 = vrot.slane %v759, 1
    %v833 = vrot.slane %v760, 1
    %v834 = vsel %vm807, %v832, %v833
    %v835 = vrot.slane %v761, 1
    %v836 = vrot.slane %v762, 1
    %v837 = vsel %vm807, %v835, %v836
    %v838 = vrot.slane %v763, 1
    %v839 = vrot.slane %v764, 1
    %v840 = vsel %vm807, %v838, %v839
    %v841 = vrot.slane %v765, 1
    %v842 = vrot.slane %v766, 1
    %v843 = vsel %vm807, %v841, %v842
    %v844 = vrot.slane %v767, 1
    %v845 = vrot.slane %v768, 1
    %v846 = vsel %vm807, %v844, %v845
    %v847 = vrot.slane %v769, 1
    %v848 = vrot.slane %v770, 1
    %v849 = vsel %vm807, %v847, %v848
    %v850 = vrot.slane %v771, 1
    %v851 = vrot.slane %v772, 1
    %v852 = vsel %vm807, %v850, %v851
    %v853 = vrot.slane %v773, 1
    %v854 = vrot.slane %v774, 1
    %v855 = vsel %vm807, %v853, %v854
    %v872 = vadd.f32 %v726, %v810
    %v873 = vadd.f32 %v727, %v813
    %v874 = vadd.f32 %v728, %v816
    %v875 = vadd.f32 %v729, %v819
    %v876 = vadd.f32 %v730, %v822
    %v877 = vadd.f32 %v731, %v825
    %v878 = vadd.f32 %v732, %v828
    %v879 = vadd.f32 %v733, %v831
    %v880 = vadd.f32 %v734, %v834
    %v881 = vadd.f32 %v735, %v837
    %v882 = vadd.f32 %v736, %v840
    %v883 = vadd.f32 %v737, %v843
    %v884 = vadd.f32 %v738, %v846
    %v885 = vadd.f32 %v739, %v849
    %v886 = vadd.f32 %v740, %v852
    %v887 = vadd.f32 %v741, %v855
    %v888 = vld [vmem:[%s1 + $0x27] ss:$0 sm:$0xff]
    %v889 = vmul.f32 %v677, %v888
    %v890 = vmul.f32 %v678, %v888
    %v891 = vmul.f32 %v679, %v888
    %v892 = vmul.f32 %v680, %v888
    %v893 = vmul.f32 %v681, %v888
    %v894 = vmul.f32 %v682, %v888
    %v895 = vmul.f32 %v683, %v888
    %v896 = vmul.f32 %v684, %v888
    %v897 = vmul.f32 %v685, %v888
    %v898 = vmul.f32 %v686, %v888
    %v899 = vmul.f32 %v687, %v888
    %v900 = vmul.f32 %v688, %v888
    %v901 = vmul.f32 %v689, %v888
    %v902 = vmul.f32 %v690, %v888
    %v903 = vmul.f32 %v691, %v888
    %v904 = vmul.f32 %v692, %v888
    %v905 = vmul.f32 %v693, %v888
    %v906 = vmul.f32 %v694, %v888
    %v907 = vmul.f32 %v695, %v888
    %v908 = vmul.f32 %v696, %v888
    %v909 = vmul.f32 %v697, %v888
    %v910 = vmul.f32 %v698, %v888
    %v911 = vmul.f32 %v699, %v888
    %v912 = vmul.f32 %v700, %v888
    %v913 = vmul.f32 %v701, %v888
    %v914 = vmul.f32 %v702, %v888
    %v915 = vmul.f32 %v703, %v888
    %v916 = vmul.f32 %v704, %v888
    %v917 = vmul.f32 %v705, %v888
    %v918 = vmul.f32 %v706, %v888
    %v919 = vmul.f32 %v707, %v888
    %v920 = vmul.f32 %v708, %v888
    %vm953 = vcmask 1045504
    %v954 = vrot.slane %v889, 2
    %v955 = vrot.slane %v890, 2
    %v956 = vsel %vm953, %v954, %v955
    %v957 = vrot.slane %v891, 2
    %v958 = vrot.slane %v892, 2
    %v959 = vsel %vm953, %v957, %v958
    %v960 = vrot.slane %v893, 2
    %v961 = vrot.slane %v894, 2
    %v962 = vsel %vm953, %v960, %v961
    %v963 = vrot.slane %v895, 2
    %v964 = vrot.slane %v896, 2
    %v965 = vsel %vm953, %v963, %v964
    %v966 = vrot.slane %v897, 2
    %v967 = vrot.slane %v898, 2
    %v968 = vsel %vm953, %v966, %v967
    %v969 = vrot.slane %v899, 2
    %v970 = vrot.slane %v900, 2
    %v971 = vsel %vm953, %v969, %v970
    %v972 = vrot.slane %v901, 2
    %v973 = vrot.slane %v902, 2
    %v974 = vsel %vm953, %v972, %v973
    %v975 = vrot.slane %v903, 2
    %v976 = vrot.slane %v904, 2
    %v977 = vsel %vm953, %v975, %v976
    %v978 = vrot.slane %v905, 2
    %v979 = vrot.slane %v906, 2
    %v980 = vsel %vm953, %v978, %v979
    %v981 = vrot.slane %v907, 2
    %v982 = vrot.slane %v908, 2
    %v983 = vsel %vm953, %v981, %v982
    %v984 = vrot.slane %v909, 2
    %v985 = vrot.slane %v910, 2
    %v986 = vsel %vm953, %v984, %v985
    %v987 = vrot.slane %v911, 2
    %v988 = vrot.slane %v912, 2
    %v989 = vsel %vm953, %v987, %v988
    %v990 = vrot.slane %v913, 2
    %v991 = vrot.slane %v914, 2
    %v992 = vsel %vm953, %v990, %v991
    %v993 = vrot.slane %v915, 2
    %v994 = vrot.slane %v916, 2
    %v995 = vsel %vm953, %v993, %v994
    %v996 = vrot.slane %v917, 2
    %v997 = vrot.slane %v918, 2
    %v998 = vsel %vm953, %v996, %v997
    %v999 = vrot.slane %v919, 2
    %v1000 = vrot.slane %v920, 2
    %v1001 = vsel %vm953, %v999, %v1000
    %v1018 = vadd.f32 %v872, %v956
    %v1019 = vadd.f32 %v873, %v959
    %v1020 = vadd.f32 %v874, %v962
    %v1021 = vadd.f32 %v875, %v965
    %v1022 = vadd.f32 %v876, %v968
    %v1023 = vadd.f32 %v877, %v971
    %v1024 = vadd.f32 %v878, %v974
    %v1025 = vadd.f32 %v879, %v977
    %v1026 = vadd.f32 %v880, %v980
    %v1027 = vadd.f32 %v881, %v983
    %v1028 = vadd.f32 %v882, %v986
    %v1029 = vadd.f32 %v883, %v989
    %v1030 = vadd.f32 %v884, %v992
    %v1031 = vadd.f32 %v885, %v995
    %v1032 = vadd.f32 %v886, %v998
    %v1033 = vadd.f32 %v887, %v1001
    %v1034 = vld [vmem:[%s660] sm:$0xff]
    %v1035 = vld [vmem:[%s660 + $0x8] sm:$0x3]
    %v1036 = vld [vmem:[%s660 + $0x10] sm:$0xff]
    %v1037 = vld [vmem:[%s660 + $0x18] sm:$0x3]
    %v1038 = vld [vmem:[%s660 + $0x20] sm:$0xff]
    %v1039 = vld [vmem:[%s660 + $0x28] sm:$0x3]
    %v1040 = vld [vmem:[%s660 + $0x30] sm:$0xff]
    %v1041 = vld [vmem:[%s660 + $0x38] sm:$0x3]
    %v1042 = vld [vmem:[%s660 + $0x40] sm:$0xff]
    %v1043 = vld [vmem:[%s660 + $0x48] sm:$0x3]
    %v1044 = vld [vmem:[%s660 + $0x50] sm:$0xff]
    %v1045 = vld [vmem:[%s660 + $0x58] sm:$0x3]
    %v1046 = vld [vmem:[%s660 + $0x60] sm:$0xff]
    %v1047 = vld [vmem:[%s660 + $0x68] sm:$0x3]
    %v1048 = vld [vmem:[%s660 + $0x70] sm:$0xff]
    %v1049 = vld [vmem:[%s660 + $0x78] sm:$0x3]
    %v1050 = vld [vmem:[%s660 + $0xa0] sm:$0xff]
    %v1051 = vld [vmem:[%s660 + $0xa8] sm:$0x3]
    %v1052 = vld [vmem:[%s660 + $0xb0] sm:$0xff]
    %v1053 = vld [vmem:[%s660 + $0xb8] sm:$0x3]
    %v1054 = vld [vmem:[%s660 + $0xc0] sm:$0xff]
    %v1055 = vld [vmem:[%s660 + $0xc8] sm:$0x3]
    %v1056 = vld [vmem:[%s660 + $0xd0] sm:$0xff]
    %v1057 = vld [vmem:[%s660 + $0xd8] sm:$0x3]
    %v1058 = vld [vmem:[%s660 + $0xe0] sm:$0xff]
    %v1059 = vld [vmem:[%s660 + $0xe8] sm:$0x3]
    %v1060 = vld [vmem:[%s660 + $0xf0] sm:$0xff]
    %v1061 = vld [vmem:[%s660 + $0xf8] sm:$0x3]
    %v1062 = vld [vmem:[%s660 + $0x100] sm:$0xff]
    %v1063 = vld [vmem:[%s660 + $0x108] sm:$0x3]
    %v1064 = vld [vmem:[%s660 + $0x110] sm:$0xff]
    %v1065 = vld [vmem:[%s660 + $0x118] sm:$0x3]
    %v1066 = vld [vmem:[%s1 + $0x40] ss:$0 sm:$0xff]
    %v1067 = vmul.f32 %v1034, %v1066
    %v1068 = vmul.f32 %v1036, %v1066
    %v1069 = vmul.f32 %v1038, %v1066
    %v1070 = vmul.f32 %v1040, %v1066
    %v1071 = vmul.f32 %v1042, %v1066
    %v1072 = vmul.f32 %v1044, %v1066
    %v1073 = vmul.f32 %v1046, %v1066
    %v1074 = vmul.f32 %v1048, %v1066
    %v1075 = vmul.f32 %v1050, %v1066
    %v1076 = vmul.f32 %v1052, %v1066
    %v1077 = vmul.f32 %v1054, %v1066
    %v1078 = vmul.f32 %v1056, %v1066
    %v1079 = vmul.f32 %v1058, %v1066
    %v1080 = vmul.f32 %v1060, %v1066
    %v1081 = vmul.f32 %v1062, %v1066
    %v1082 = vmul.f32 %v1064, %v1066
    %v1083 = vadd.f32 %v1018, %v1067
    %v1084 = vadd.f32 %v1019, %v1068
    %v1085 = vadd.f32 %v1020, %v1069
    %v1086 = vadd.f32 %v1021, %v1070
    %v1087 = vadd.f32 %v1022, %v1071
    %v1088 = vadd.f32 %v1023, %v1072
    %v1089 = vadd.f32 %v1024, %v1073
    %v1090 = vadd.f32 %v1025, %v1074
    %v1091 = vadd.f32 %v1026, %v1075
    %v1092 = vadd.f32 %v1027, %v1076
    %v1093 = vadd.f32 %v1028, %v1077
    %v1094 = vadd.f32 %v1029, %v1078
    %v1095 = vadd.f32 %v1030, %v1079
    %v1096 = vadd.f32 %v1031, %v1080
    %v1097 = vadd.f32 %v1032, %v1081
    %v1098 = vadd.f32 %v1033, %v1082
    %v1099 = vld [vmem:[%s1 + $0x41] ss:$0 sm:$0xff]
    %v1100 = vmul.f32 %v1034, %v1099
    %v1101 = vmul.f32 %v1035, %v1099
    %v1102 = vmul.f32 %v1036, %v1099
    %v1103 = vmul.f32 %v1037, %v1099
    %v1104 = vmul.f32 %v1038, %v1099
    %v1105 = vmul.f32 %v1039, %v1099
    %v1106 = vmul.f32 %v1040, %v1099
    %v1107 = vmul.f32 %v1041, %v1099
    %v1108 = vmul.f32 %v1042, %v1099
    %v1109 = vmul.f32 %v1043, %v1099
    %v1110 = vmul.f32 %v1044, %v1099
    %v1111 = vmul.f32 %v1045, %v1099
    %v1112 = vmul.f32 %v1046, %v1099
    %v1113 = vmul.f32 %v1047, %v1099
    %v1114 = vmul.f32 %v1048, %v1099
    %v1115 = vmul.f32 %v1049, %v1099
    %v1116 = vmul.f32 %v1050, %v1099
    %v1117 = vmul.f32 %v1051, %v1099
    %v1118 = vmul.f32 %v1052, %v1099
    %v1119 = vmul.f32 %v1053, %v1099
    %v1120 = vmul.f32 %v1054, %v1099
    %v1121 = vmul.f32 %v1055, %v1099
    %v1122 = vmul.f32 %v1056, %v1099
    %v1123 = vmul.f32 %v1057, %v1099
    %v1124 = vmul.f32 %v1058, %v1099
    %v1125 = vmul.f32 %v1059, %v1099
    %v1126 = vmul.f32 %v1060, %v1099
    %v1127 = vmul.f32 %v1061, %v1099
    %v1128 = vmul.f32 %v1062, %v1099
    %v1129 = vmul.f32 %v1063, %v1099
    %v1130 = vmul.f32 %v1064, %v1099
    %v1131 = vmul.f32 %v1065, %v1099
    %v1164 = vrot.slane %v1100, 1
    %v1165 = vrot.slane %v1101, 1
    %v1166 = vsel %vm807, %v1164, %v1165
    %v1167 = vrot.slane %v1102, 1
    %v1168 = vrot.slane %v1103, 1
    %v1169 = vsel %vm807, %v1167, %v1168
    %v1170 = vrot.slane %v1104, 1
    %v1171 = vrot.slane %v1105, 1
    %v1172 = vsel %vm807, %v1170, %v1171
    %v1173 = vrot.slane %v1106, 1
    %v1174 = vrot.slane %v1107, 1
    %v1175 = vsel %vm807, %v1173, %v1174
    %v1176 = vrot.slane %v1108, 1
    %v1177 = vrot.slane %v1109, 1
    %v1178 = vsel %vm807, %v1176, %v1177
    %v1179 = vrot.slane %v1110, 1
    %v1180 = vrot.slane %v1111, 1
    %v1181 = vsel %vm807, %v1179, %v1180
    %v1182 = vrot.slane %v1112, 1
    %v1183 = vrot.slane %v1113, 1
    %v1184 = vsel %vm807, %v1182, %v1183
    %v1185 = vrot.slane %v1114, 1
    %v1186 = vrot.slane %v1115, 1
    %v1187 = vsel %vm807, %v1185, %v1186
    %v1188 = vrot.slane %v1116, 1
    %v1189 = vrot.slane %v1117, 1
    %v1190 = vsel %vm807, %v1188, %v1189
    %v1191 = vrot.slane %v1118, 1
    %v1192 = vrot.slane %v1119, 1
    %v1193 = vsel %vm807, %v1191, %v1192
    %v1194 = vrot.slane %v1120, 1
    %v1195 = vrot.slane %v1121, 1
    %v1196 = vsel %vm807, %v1194, %v1195
    %v1197 = vrot.slane %v1122, 1
    %v1198 = vrot.slane %v1123, 1
    %v1199 = vsel %vm807, %v1197, %v1198
    %v1200 = vrot.slane %v1124, 1
    %v1201 = vrot.slane %v1125, 1
    %v1202 = vsel %vm807, %v1200, %v1201
    %v1203 = vrot.slane %v1126, 1
    %v1204 = vrot.slane %v1127, 1
    %v1205 = vsel %vm807, %v1203, %v1204
    %v1206 = vrot.slane %v1128, 1
    %v1207 = vrot.slane %v1129, 1
    %v1208 = vsel %vm807, %v1206, %v1207
    %v1209 = vrot.slane %v1130, 1
    %v1210 = vrot.slane %v1131, 1
    %v1211 = vsel %vm807, %v1209, %v1210
    %v1228 = vadd.f32 %v1083, %v1166
    %v1229 = vadd.f32 %v1084, %v1169
    %v1230 = vadd.f32 %v1085, %v1172
    %v1231 = vadd.f32 %v1086, %v1175
    %v1232 = vadd.f32 %v1087, %v1178
    %v1233 = vadd.f32 %v1088, %v1181
    %v1234 = vadd.f32 %v1089, %v1184
    %v1235 = vadd.f32 %v1090, %v1187
    %v1236 = vadd.f32 %v1091, %v1190
    %v1237 = vadd.f32 %v1092, %v1193
    %v1238 = vadd.f32 %v1093, %v1196
    %v1239 = vadd.f32 %v1094, %v1199
    %v1240 = vadd.f32 %v1095, %v1202
    %v1241 = vadd.f32 %v1096, %v1205
    %v1242 = vadd.f32 %v1097, %v1208
    %v1243 = vadd.f32 %v1098, %v1211
    %v1244 = vld [vmem:[%s1 + $0x42] ss:$0 sm:$0xff]
    %v1245 = vmul.f32 %v1034, %v1244
    %v1246 = vmul.f32 %v1035, %v1244
    %v1247 = vmul.f32 %v1036, %v1244
    %v1248 = vmul.f32 %v1037, %v1244
    %v1249 = vmul.f32 %v1038, %v1244
    %v1250 = vmul.f32 %v1039, %v1244
    %v1251 = vmul.f32 %v1040, %v1244
    %v1252 = vmul.f32 %v1041, %v1244
    %v1253 = vmul.f32 %v1042, %v1244
    %v1254 = vmul.f32 %v1043, %v1244
    %v1255 = vmul.f32 %v1044, %v1244
    %v1256 = vmul.f32 %v1045, %v1244
    %v1257 = vmul.f32 %v1046, %v1244
    %v1258 = vmul.f32 %v1047, %v1244
    %v1259 = vmul.f32 %v1048, %v1244
    %v1260 = vmul.f32 %v1049, %v1244
    %v1261 = vmul.f32 %v1050, %v1244
    %v1262 = vmul.f32 %v1051, %v1244
    %v1263 = vmul.f32 %v1052, %v1244
    %v1264 = vmul.f32 %v1053, %v1244
    %v1265 = vmul.f32 %v1054, %v1244
    %v1266 = vmul.f32 %v1055, %v1244
    %v1267 = vmul.f32 %v1056, %v1244
    %v1268 = vmul.f32 %v1057, %v1244
    %v1269 = vmul.f32 %v1058, %v1244
    %v1270 = vmul.f32 %v1059, %v1244
    %v1271 = vmul.f32 %v1060, %v1244
    %v1272 = vmul.f32 %v1061, %v1244
    %v1273 = vmul.f32 %v1062, %v1244
    %v1274 = vmul.f32 %v1063, %v1244
    %v1275 = vmul.f32 %v1064, %v1244
    %v1276 = vmul.f32 %v1065, %v1244
    %v1309 = vrot.slane %v1245, 2
    %v1310 = vrot.slane %v1246, 2
    %v1311 = vsel %vm953, %v1309, %v1310
    %v1312 = vrot.slane %v1247, 2
    %v1313 = vrot.slane %v1248, 2
    %v1314 = vsel %vm953, %v1312, %v1313
    %v1315 = vrot.slane %v1249, 2
    %v1316 = vrot.slane %v1250, 2
    %v1317 = vsel %vm953, %v1315, %v1316
    %v1318 = vrot.slane %v1251, 2
    %v1319 = vrot.slane %v1252, 2
    %v1320 = vsel %vm953, %v1318, %v1319
    %v1321 = vrot.slane %v1253, 2
    %v1322 = vrot.slane %v1254, 2
    %v1323 = vsel %vm953, %v1321, %v1322
    %v1324 = vrot.slane %v1255, 2
    %v1325 = vrot.slane %v1256, 2
    %v1326 = vsel %vm953, %v1324, %v1325
    %v1327 = vrot.slane %v1257, 2
    %v1328 = vrot.slane %v1258, 2
    %v1329 = vsel %vm953, %v1327, %v1328
    %v1330 = vrot.slane %v1259, 2
    %v1331 = vrot.slane %v1260, 2
    %v1332 = vsel %vm953, %v1330, %v1331
    %v1333 = vrot.slane %v1261, 2
    %v1334 = vrot.slane %v1262, 2
    %v1335 = vsel %vm953, %v1333, %v1334
    %v1336 = vrot.slane %v1263, 2
    %v1337 = vrot.slane %v1264, 2
    %v1338 = vsel %vm953, %v1336, %v1337
    %v1339 = vrot.slane %v1265, 2
    %v1340 = vrot.slane %v1266, 2
    %v1341 = vsel %vm953, %v1339, %v1340
    %v1342 = vrot.slane %v1267, 2
    %v1343 = vrot.slane %v1268, 2
    %v1344 = vsel %vm953, %v1342, %v1343
    %v1345 = vrot.slane %v1269, 2
    %v1346 = vrot.slane %v1270, 2
    %v1347 = vsel %vm953, %v1345, %v1346
    %v1348 = vrot.slane %v1271, 2
    %v1349 = vrot.slane %v1272, 2
    %v1350 = vsel %vm953, %v1348, %v1349
    %v1351 = vrot.slane %v1273, 2
    %v1352 = vrot.slane %v1274, 2
    %v1353 = vsel %vm953, %v1351, %v1352
    %v1354 = vrot.slane %v1275, 2
    %v1355 = vrot.slane %v1276, 2
    %v1356 = vsel %vm953, %v1354, %v1355
    %v1373 = vadd.f32 %v1228, %v1311
    %v1374 = vadd.f32 %v1229, %v1314
    %v1375 = vadd.f32 %v1230, %v1317
    %v1376 = vadd.f32 %v1231, %v1320
    %v1377 = vadd.f32 %v1232, %v1323
    %v1378 = vadd.f32 %v1233, %v1326
    %v1379 = vadd.f32 %v1234, %v1329
    %v1380 = vadd.f32 %v1235, %v1332
    %v1381 = vadd.f32 %v1236, %v1335
    %v1382 = vadd.f32 %v1237, %v1338
    %v1383 = vadd.f32 %v1238, %v1341
    %v1384 = vadd.f32 %v1239, %v1344
    %v1385 = vadd.f32 %v1240, %v1347
    %v1386 = vadd.f32 %v1241, %v1350
    %v1387 = vadd.f32 %v1242, %v1353
    %v1388 = vadd.f32 %v1243, %v1356
    %s1389 = scalar_lea.vmem [#allocation2], 32
    %v1390 = vld [vmem:[%s1389] sm:$0xff]
    %v1391 = vld [vmem:[%s1389 + $0x8] sm:$0x3]
    %v1392 = vld [vmem:[%s1389 + $0x10] sm:$0xff]
    %v1393 = vld [vmem:[%s1389 + $0x18] sm:$0x3]
    %v1394 = vld [vmem:[%s1389 + $0x20] sm:$0xff]
    %v1395 = vld [vmem:[%s1389 + $0x28] sm:$0x3]
    %v1396 = vld [vmem:[%s1389 + $0x30] sm:$0xff]
    %v1397 = vld [vmem:[%s1389 + $0x38] sm:$0x3]
    %v1398 = vld [vmem:[%s1389 + $0x40] sm:$0xff]
    %v1399 = vld [vmem:[%s1389 + $0x48] sm:$0x3]
    %v1400 = vld [vmem:[%s1389 + $0x50] sm:$0xff]
    %v1401 = vld [vmem:[%s1389 + $0x58] sm:$0x3]
    %v1402 = vld [vmem:[%s1389 + $0x60] sm:$0xff]
    %v1403 = vld [vmem:[%s1389 + $0x68] sm:$0x3]
    %v1404 = vld [vmem:[%s1389 + $0x70] sm:$0xff]
    %v1405 = vld [vmem:[%s1389 + $0x78] sm:$0x3]
    %v1406 = vld [vmem:[%s1389 + $0xa0] sm:$0xff]
    %v1407 = vld [vmem:[%s1389 + $0xa8] sm:$0x3]
    %v1408 = vld [vmem:[%s1389 + $0xb0] sm:$0xff]
    %v1409 = vld [vmem:[%s1389 + $0xb8] sm:$0x3]
    %v1410 = vld [vmem:[%s1389 + $0xc0] sm:$0xff]
    %v1411 = vld [vmem:[%s1389 + $0xc8] sm:$0x3]
    %v1412 = vld [vmem:[%s1389 + $0xd0] sm:$0xff]
    %v1413 = vld [vmem:[%s1389 + $0xd8] sm:$0x3]
    %v1414 = vld [vmem:[%s1389 + $0xe0] sm:$0xff]
    %v1415 = vld [vmem:[%s1389 + $0xe8] sm:$0x3]
    %v1416 = vld [vmem:[%s1389 + $0xf0] sm:$0xff]
    %v1417 = vld [vmem:[%s1389 + $0xf8] sm:$0x3]
    %v1418 = vld [vmem:[%s1389 + $0x100] sm:$0xff]
    %v1419 = vld [vmem:[%s1389 + $0x108] sm:$0x3]
    %v1420 = vld [vmem:[%s1389 + $0x110] sm:$0xff]
    %v1421 = vld [vmem:[%s1389 + $0x118] sm:$0x3]
    %v1422 = vld [vmem:[%s1 + $0x43] ss:$0 sm:$0xff]
    %v1423 = vmul.f32 %v1390, %v1422
    %v1424 = vmul.f32 %v1392, %v1422
    %v1425 = vmul.f32 %v1394, %v1422
    %v1426 = vmul.f32 %v1396, %v1422
    %v1427 = vmul.f32 %v1398, %v1422
    %v1428 = vmul.f32 %v1400, %v1422
    %v1429 = vmul.f32 %v1402, %v1422
    %v1430 = vmul.f32 %v1404, %v1422
    %v1431 = vmul.f32 %v1406, %v1422
    %v1432 = vmul.f32 %v1408, %v1422
    %v1433 = vmul.f32 %v1410, %v1422
    %v1434 = vmul.f32 %v1412, %v1422
    %v1435 = vmul.f32 %v1414, %v1422
    %v1436 = vmul.f32 %v1416, %v1422
    %v1437 = vmul.f32 %v1418, %v1422
    %v1438 = vmul.f32 %v1420, %v1422
    %v1439 = vadd.f32 %v1373, %v1423
    %v1440 = vadd.f32 %v1374, %v1424
    %v1441 = vadd.f32 %v1375, %v1425
    %v1442 = vadd.f32 %v1376, %v1426
    %v1443 = vadd.f32 %v1377, %v1427
    %v1444 = vadd.f32 %v1378, %v1428
    %v1445 = vadd.f32 %v1379, %v1429
    %v1446 = vadd.f32 %v1380, %v1430
    %v1447 = vadd.f32 %v1381, %v1431
    %v1448 = vadd.f32 %v1382, %v1432
    %v1449 = vadd.f32 %v1383, %v1433
    %v1450 = vadd.f32 %v1384, %v1434
    %v1451 = vadd.f32 %v1385, %v1435
    %v1452 = vadd.f32 %v1386, %v1436
    %v1453 = vadd.f32 %v1387, %v1437
    %v1454 = vadd.f32 %v1388, %v1438
    %v1455 = vld [vmem:[%s1 + $0x44] ss:$0 sm:$0xff]
    %v1456 = vmul.f32 %v1390, %v1455
    %v1457 = vmul.f32 %v1391, %v1455
    %v1458 = vmul.f32 %v1392, %v1455
    %v1459 = vmul.f32 %v1393, %v1455
    %v1460 = vmul.f32 %v1394, %v1455
    %v1461 = vmul.f32 %v1395, %v1455
    %v1462 = vmul.f32 %v1396, %v1455
    %v1463 = vmul.f32 %v1397, %v1455
    %v1464 = vmul.f32 %v1398, %v1455
    %v1465 = vmul.f32 %v1399, %v1455
    %v1466 = vmul.f32 %v1400, %v1455
    %v1467 = vmul.f32 %v1401, %v1455
    %v1468 = vmul.f32 %v1402, %v1455
    %v1469 = vmul.f32 %v1403, %v1455
    %v1470 = vmul.f32 %v1404, %v1455
    %v1471 = vmul.f32 %v1405, %v1455
    %v1472 = vmul.f32 %v1406, %v1455
    %v1473 = vmul.f32 %v1407, %v1455
    %v1474 = vmul.f32 %v1408, %v1455
    %v1475 = vmul.f32 %v1409, %v1455
    %v1476 = vmul.f32 %v1410, %v1455
    %v1477 = vmul.f32 %v1411, %v1455
    %v1478 = vmul.f32 %v1412, %v1455
    %v1479 = vmul.f32 %v1413, %v1455
    %v1480 = vmul.f32 %v1414, %v1455
    %v1481 = vmul.f32 %v1415, %v1455
    %v1482 = vmul.f32 %v1416, %v1455
    %v1483 = vmul.f32 %v1417, %v1455
    %v1484 = vmul.f32 %v1418, %v1455
    %v1485 = vmul.f32 %v1419, %v1455
    %v1486 = vmul.f32 %v1420, %v1455
    %v1487 = vmul.f32 %v1421, %v1455
    %v1520 = vrot.slane %v1456, 1
    %v1521 = vrot.slane %v1457, 1
    %v1522 = vsel %vm807, %v1520, %v1521
    %v1523 = vrot.slane %v1458, 1
    %v1524 = vrot.slane %v1459, 1
    %v1525 = vsel %vm807, %v1523, %v1524
    %v1526 = vrot.slane %v1460, 1
    %v1527 = vrot.slane %v1461, 1
    %v1528 = vsel %vm807, %v1526, %v1527
    %v1529 = vrot.slane %v1462, 1
    %v1530 = vrot.slane %v1463, 1
    %v1531 = vsel %vm807, %v1529, %v1530
    %v1532 = vrot.slane %v1464, 1
    %v1533 = vrot.slane %v1465, 1
    %v1534 = vsel %vm807, %v1532, %v1533
    %v1535 = vrot.slane %v1466, 1
    %v1536 = vrot.slane %v1467, 1
    %v1537 = vsel %vm807, %v1535, %v1536
    %v1538 = vrot.slane %v1468, 1
    %v1539 = vrot.slane %v1469, 1
    %v1540 = vsel %vm807, %v1538, %v1539
    %v1541 = vrot.slane %v1470, 1
    %v1542 = vrot.slane %v1471, 1
    %v1543 = vsel %vm807, %v1541, %v1542
    %v1544 = vrot.slane %v1472, 1
    %v1545 = vrot.slane %v1473, 1
    %v1546 = vsel %vm807, %v1544, %v1545
    %v1547 = vrot.slane %v1474, 1
    %v1548 = vrot.slane %v1475, 1
    %v1549 = vsel %vm807, %v1547, %v1548
    %v1550 = vrot.slane %v1476, 1
    %v1551 = vrot.slane %v1477, 1
    %v1552 = vsel %vm807, %v1550, %v1551
    %v1553 = vrot.slane %v1478, 1
    %v1554 = vrot.slane %v1479, 1
    %v1555 = vsel %vm807, %v1553, %v1554
    %v1556 = vrot.slane %v1480, 1
    %v1557 = vrot.slane %v1481, 1
    %v1558 = vsel %vm807, %v1556, %v1557
    %v1559 = vrot.slane %v1482, 1
    %v1560 = vrot.slane %v1483, 1
    %v1561 = vsel %vm807, %v1559, %v1560
    %v1562 = vrot.slane %v1484, 1
    %v1563 = vrot.slane %v1485, 1
    %v1564 = vsel %vm807, %v1562, %v1563
    %v1565 = vrot.slane %v1486, 1
    %v1566 = vrot.slane %v1487, 1
    %v1567 = vsel %vm807, %v1565, %v1566
    %v1584 = vadd.f32 %v1439, %v1522
    %v1585 = vadd.f32 %v1440, %v1525
    %v1586 = vadd.f32 %v1441, %v1528
    %v1587 = vadd.f32 %v1442, %v1531
    %v1588 = vadd.f32 %v1443, %v1534
    %v1589 = vadd.f32 %v1444, %v1537
    %v1590 = vadd.f32 %v1445, %v1540
    %v1591 = vadd.f32 %v1446, %v1543
    %v1592 = vadd.f32 %v1447, %v1546
    %v1593 = vadd.f32 %v1448, %v1549
    %v1594 = vadd.f32 %v1449, %v1552
    %v1595 = vadd.f32 %v1450, %v1555
    %v1596 = vadd.f32 %v1451, %v1558
    %v1597 = vadd.f32 %v1452, %v1561
    %v1598 = vadd.f32 %v1453, %v1564
    %v1599 = vadd.f32 %v1454, %v1567
    %v1600 = vld [vmem:[%s1 + $0x45] ss:$0 sm:$0xff]
    %v1601 = vmul.f32 %v1390, %v1600
    %v1602 = vmul.f32 %v1391, %v1600
    %v1603 = vmul.f32 %v1392, %v1600
    %v1604 = vmul.f32 %v1393, %v1600
    %v1605 = vmul.f32 %v1394, %v1600
    %v1606 = vmul.f32 %v1395, %v1600
    %v1607 = vmul.f32 %v1396, %v1600
    %v1608 = vmul.f32 %v1397, %v1600
    %v1609 = vmul.f32 %v1398, %v1600
    %v1610 = vmul.f32 %v1399, %v1600
    %v1611 = vmul.f32 %v1400, %v1600
    %v1612 = vmul.f32 %v1401, %v1600
    %v1613 = vmul.f32 %v1402, %v1600
    %v1614 = vmul.f32 %v1403, %v1600
    %v1615 = vmul.f32 %v1404, %v1600
    %v1616 = vmul.f32 %v1405, %v1600
    %v1617 = vmul.f32 %v1406, %v1600
    %v1618 = vmul.f32 %v1407, %v1600
    %v1619 = vmul.f32 %v1408, %v1600
    %v1620 = vmul.f32 %v1409, %v1600
    %v1621 = vmul.f32 %v1410, %v1600
    %v1622 = vmul.f32 %v1411, %v1600
    %v1623 = vmul.f32 %v1412, %v1600
    %v1624 = vmul.f32 %v1413, %v1600
    %v1625 = vmul.f32 %v1414, %v1600
    %v1626 = vmul.f32 %v1415, %v1600
    %v1627 = vmul.f32 %v1416, %v1600
    %v1628 = vmul.f32 %v1417, %v1600
    %v1629 = vmul.f32 %v1418, %v1600
    %v1630 = vmul.f32 %v1419, %v1600
    %v1631 = vmul.f32 %v1420, %v1600
    %v1632 = vmul.f32 %v1421, %v1600
    %v1665 = vrot.slane %v1601, 2
    %v1666 = vrot.slane %v1602, 2
    %v1667 = vsel %vm953, %v1665, %v1666
    %v1668 = vrot.slane %v1603, 2
    %v1669 = vrot.slane %v1604, 2
    %v1670 = vsel %vm953, %v1668, %v1669
    %v1671 = vrot.slane %v1605, 2
    %v1672 = vrot.slane %v1606, 2
    %v1673 = vsel %vm953, %v1671, %v1672
    %v1674 = vrot.slane %v1607, 2
    %v1675 = vrot.slane %v1608, 2
    %v1676 = vsel %vm953, %v1674, %v1675
    %v1677 = vrot.slane %v1609, 2
    %v1678 = vrot.slane %v1610, 2
    %v1679 = vsel %vm953, %v1677, %v1678
    %v1680 = vrot.slane %v1611, 2
    %v1681 = vrot.slane %v1612, 2
    %v1682 = vsel %vm953, %v1680, %v1681
    %v1683 = vrot.slane %v1613, 2
    %v1684 = vrot.slane %v1614, 2
    %v1685 = vsel %vm953, %v1683, %v1684
    %v1686 = vrot.slane %v1615, 2
    %v1687 = vrot.slane %v1616, 2
    %v1688 = vsel %vm953, %v1686, %v1687
    %v1689 = vrot.slane %v1617, 2
    %v1690 = vrot.slane %v1618, 2
    %v1691 = vsel %vm953, %v1689, %v1690
    %v1692 = vrot.slane %v1619, 2
    %v1693 = vrot.slane %v1620, 2
    %v1694 = vsel %vm953, %v1692, %v1693
    %v1695 = vrot.slane %v1621, 2
    %v1696 = vrot.slane %v1622, 2
    %v1697 = vsel %vm953, %v1695, %v1696
    %v1698 = vrot.slane %v1623, 2
    %v1699 = vrot.slane %v1624, 2
    %v1700 = vsel %vm953, %v1698, %v1699
    %v1701 = vrot.slane %v1625, 2
    %v1702 = vrot.slane %v1626, 2
    %v1703 = vsel %vm953, %v1701, %v1702
    %v1704 = vrot.slane %v1627, 2
    %v1705 = vrot.slane %v1628, 2
    %v1706 = vsel %vm953, %v1704, %v1705
    %v1707 = vrot.slane %v1629, 2
    %v1708 = vrot.slane %v1630, 2
    %v1709 = vsel %vm953, %v1707, %v1708
    %v1710 = vrot.slane %v1631, 2
    %v1711 = vrot.slane %v1632, 2
    %v1712 = vsel %vm953, %v1710, %v1711
    %v1729 = vadd.f32 %v1584, %v1667
    %v1730 = vadd.f32 %v1585, %v1670
    %v1731 = vadd.f32 %v1586, %v1673
    %v1732 = vadd.f32 %v1587, %v1676
    %v1733 = vadd.f32 %v1588, %v1679
    %v1734 = vadd.f32 %v1589, %v1682
    %v1735 = vadd.f32 %v1590, %v1685
    %v1736 = vadd.f32 %v1591, %v1688
    %v1737 = vadd.f32 %v1592, %v1691
    %v1738 = vadd.f32 %v1593, %v1694
    %v1739 = vadd.f32 %v1594, %v1697
    %v1740 = vadd.f32 %v1595, %v1700
    %v1741 = vadd.f32 %v1596, %v1703
    %v1742 = vadd.f32 %v1597, %v1706
    %v1743 = vadd.f32 %v1598, %v1709
    %v1744 = vadd.f32 %v1599, %v1712
    %v1745 = vld [vmem:[%s1 + $0x4] ss:$0 sm:$0xff]
    %v1746 = vmul.f32 %v1729, %v1745
    %v1747 = vmul.f32 %v1730, %v1745
    %v1748 = vmul.f32 %v1731, %v1745
    %v1749 = vmul.f32 %v1732, %v1745
    %v1750 = vmul.f32 %v1733, %v1745
    %v1751 = vmul.f32 %v1734, %v1745
    %v1752 = vmul.f32 %v1735, %v1745
    %v1753 = vmul.f32 %v1736, %v1745
    %v1754 = vmul.f32 %v1737, %v1745
    %v1755 = vmul.f32 %v1738, %v1745
    %v1756 = vmul.f32 %v1739, %v1745
    %v1757 = vmul.f32 %v1740, %v1745
    %v1758 = vmul.f32 %v1741, %v1745
    %v1759 = vmul.f32 %v1742, %v1745
    %v1760 = vmul.f32 %v1743, %v1745
    %v1761 = vmul.f32 %v1744, %v1745
    %v1762 = vld [vmem:[%s1 + $0x5] ss:$0 sm:$0xff]
    %v1763 = vadd.f32 %v1746, %v1762
    %v1764 = vadd.f32 %v1747, %v1762
    %v1765 = vadd.f32 %v1748, %v1762
    %v1766 = vadd.f32 %v1749, %v1762
    %v1767 = vadd.f32 %v1750, %v1762
    %v1768 = vadd.f32 %v1751, %v1762
    %v1769 = vadd.f32 %v1752, %v1762
    %v1770 = vadd.f32 %v1753, %v1762
    %v1771 = vadd.f32 %v1754, %v1762
    %v1772 = vadd.f32 %v1755, %v1762
    %v1773 = vadd.f32 %v1756, %v1762
    %v1774 = vadd.f32 %v1757, %v1762
    %v1775 = vadd.f32 %v1758, %v1762
    %v1776 = vadd.f32 %v1759, %v1762
    %v1777 = vadd.f32 %v1760, %v1762
    %v1778 = vadd.f32 %v1761, %v1762
    %v1779 = vxor.u32 %v1763, 2147483648
    %v1780 = vxor.u32 %v1764, 2147483648
    %v1781 = vxor.u32 %v1765, 2147483648
    %v1782 = vxor.u32 %v1766, 2147483648
    %v1783 = vxor.u32 %v1767, 2147483648
    %v1784 = vxor.u32 %v1768, 2147483648
    %v1785 = vxor.u32 %v1769, 2147483648
    %v1786 = vxor.u32 %v1770, 2147483648
    %v1787 = vxor.u32 %v1771, 2147483648
    %v1788 = vxor.u32 %v1772, 2147483648
    %v1789 = vxor.u32 %v1773, 2147483648
    %v1790 = vxor.u32 %v1774, 2147483648
    %v1791 = vxor.u32 %v1775, 2147483648
    %v1792 = vxor.u32 %v1776, 2147483648
    %v1793 = vxor.u32 %v1777, 2147483648
    %v1794 = vxor.u32 %v1778, 2147483648
    %v1795 = vmul.f32 %v1779, 1.442695
    %v1796 = vpow.pop %v1795
    %v1797 = vmul.f32 %v1780, 1.442695
    %v1798 = vpow.pop %v1797
    %v1799 = vmul.f32 %v1781, 1.442695
    %v1800 = vpow.pop %v1799
    %v1801 = vmul.f32 %v1782, 1.442695
    %v1802 = vpow.pop %v1801
    %v1803 = vmul.f32 %v1783, 1.442695
    %v1804 = vpow.pop %v1803
    %v1805 = vmul.f32 %v1784, 1.442695
    %v1806 = vpow.pop %v1805
    %v1807 = vmul.f32 %v1785, 1.442695
    %v1808 = vpow.pop %v1807
    %v1809 = vmul.f32 %v1786, 1.442695
    %v1810 = vpow.pop %v1809
    %v1811 = vmul.f32 %v1787, 1.442695
    %v1812 = vpow.pop %v1811
    %v1813 = vmul.f32 %v1788, 1.442695
    %v1814 = vpow.pop %v1813
    %v1815 = vmul.f32 %v1789, 1.442695
    %v1816 = vpow.pop %v1815
    %v1817 = vmul.f32 %v1790, 1.442695
    %v1818 = vpow.pop %v1817
    %v1819 = vmul.f32 %v1791, 1.442695
    %v1820 = vpow.pop %v1819
    %v1821 = vmul.f32 %v1792, 1.442695
    %v1822 = vpow.pop %v1821
    %v1823 = vmul.f32 %v1793, 1.442695
    %v1824 = vpow.pop %v1823
    %v1825 = vmul.f32 %v1794, 1.442695
    %v1826 = vpow.pop %v1825
    %v1827 = vadd.f32 %v1796, 1.0
    %v1828 = vadd.f32 %v1798, 1.0
    %v1829 = vadd.f32 %v1800, 1.0
    %v1830 = vadd.f32 %v1802, 1.0
    %v1831 = vadd.f32 %v1804, 1.0
    %v1832 = vadd.f32 %v1806, 1.0
    %v1833 = vadd.f32 %v1808, 1.0
    %v1834 = vadd.f32 %v1810, 1.0
    %v1835 = vadd.f32 %v1812, 1.0
    %v1836 = vadd.f32 %v1814, 1.0
    %v1837 = vadd.f32 %v1816, 1.0
    %v1838 = vadd.f32 %v1818, 1.0
    %v1839 = vadd.f32 %v1820, 1.0
    %v1840 = vadd.f32 %v1822, 1.0
    %v1841 = vadd.f32 %v1824, 1.0
    %v1842 = vadd.f32 %v1826, 1.0
    %v1843 = vrcp.pop %v1827
    %v1844 = vmul.f32 1.0, %v1843
    %v1845 = vrcp.pop %v1828
    %v1846 = vmul.f32 1.0, %v1845
    %v1847 = vrcp.pop %v1829
    %v1848 = vmul.f32 1.0, %v1847
    %v1849 = vrcp.pop %v1830
    %v1850 = vmul.f32 1.0, %v1849
    %v1851 = vrcp.pop %v1831
    %v1852 = vmul.f32 1.0, %v1851
    %v1853 = vrcp.pop %v1832
    %v1854 = vmul.f32 1.0, %v1853
    %v1855 = vrcp.pop %v1833
    %v1856 = vmul.f32 1.0, %v1855
    %v1857 = vrcp.pop %v1834
    %v1858 = vmul.f32 1.0, %v1857
    %v1859 = vrcp.pop %v1835
    %v1860 = vmul.f32 1.0, %v1859
    %v1861 = vrcp.pop %v1836
    %v1862 = vmul.f32 1.0, %v1861
    %v1863 = vrcp.pop %v1837
    %v1864 = vmul.f32 1.0, %v1863
    %v1865 = vrcp.pop %v1838
    %v1866 = vmul.f32 1.0, %v1865
    %v1867 = vrcp.pop %v1839
    %v1868 = vmul.f32 1.0, %v1867
    %v1869 = vrcp.pop %v1840
    %v1870 = vmul.f32 1.0, %v1869
    %v1871 = vrcp.pop %v1841
    %v1872 = vmul.f32 1.0, %v1871
    %v1873 = vrcp.pop %v1842
    %v1874 = vmul.f32 1.0, %v1873
    %v1875 = vmul.f32 %v1763, %v1844
    %v1876 = vmul.f32 %v1764, %v1846
    %v1877 = vmul.f32 %v1765, %v1848
    %v1878 = vmul.f32 %v1766, %v1850
    %v1879 = vmul.f32 %v1767, %v1852
    %v1880 = vmul.f32 %v1768, %v1854
    %v1881 = vmul.f32 %v1769, %v1856
    %v1882 = vmul.f32 %v1770, %v1858
    %v1883 = vmul.f32 %v1771, %v1860
    %v1884 = vmul.f32 %v1772, %v1862
    %v1885 = vmul.f32 %v1773, %v1864
    %v1886 = vmul.f32 %v1774, %v1866
    %v1887 = vmul.f32 %v1775, %v1868
    %v1888 = vmul.f32 %v1776, %v1870
    %v1889 = vmul.f32 %v1777, %v1872
    %v1890 = vmul.f32 %v1778, %v1874
    %v1891 = vsel %vm618, %v1875, 0.0
    %v1892 = vsel %vm618, %v1876, 0.0
    %v1893 = vadd.f32 %v1891, %v1892
    %v1894 = vsel %vm618, %v1877, 0.0
    %v1895 = vadd.f32 %v1893, %v1894
    %v1896 = vsel %vm618, %v1878, 0.0
    %v1897 = vadd.f32 %v1895, %v1896
    %v1898 = vsel %vm618, %v1879, 0.0
    %v1899 = vadd.f32 %v1897, %v1898
    %v1900 = vsel %vm618, %v1880, 0.0
    %v1901 = vadd.f32 %v1899, %v1900
    %v1902 = vsel %vm618, %v1881, 0.0
    %v1903 = vadd.f32 %v1901, %v1902
    %v1904 = vsel %vm618, %v1882, 0.0
    %v1905 = vadd.f32 %v1903, %v1904
    %v1906 = vrot.slane %v1905, 4
    %v1907 = vadd.f32 %v1905, %v1906
    %v1908 = vrot.slane %v1907, 2
    %v1909 = vadd.f32 %v1907, %v1908
    %v1910 = vrot.slane %v1909, 1
    %v1911 = vadd.f32 %v1909, %v1910
    %v1912 = vsel %vm618, %v1883, 0.0
    %v1913 = vsel %vm618, %v1884, 0.0
    %v1914 = vadd.f32 %v1912, %v1913
    %v1915 = vsel %vm618, %v1885, 0.0
    %v1916 = vadd.f32 %v1914, %v1915
    %v1917 = vsel %vm618, %v1886, 0.0
    %v1918 = vadd.f32 %v1916, %v1917
    %v1919 = vsel %vm618, %v1887, 0.0
    %v1920 = vadd.f32 %v1918, %v1919
    %v1921 = vsel %vm618, %v1888, 0.0
    %v1922 = vadd.f32 %v1920, %v1921
    %v1923 = vsel %vm618, %v1889, 0.0
    %v1924 = vadd.f32 %v1922, %v1923
    %v1925 = vsel %vm618, %v1890, 0.0
    %v1926 = vadd.f32 %v1924, %v1925
    %v1927 = vrot.slane %v1926, 4
    %v1928 = vadd.f32 %v1926, %v1927
    %v1929 = vrot.slane %v1928, 2
    %v1930 = vadd.f32 %v1928, %v1929
    %v1931 = vrot.slane %v1930, 1
    %v1932 = vadd.f32 %v1930, %v1931
    %v1933 = vrcp.pop 64.0
    %v1934 = vmul.f32 %v1911, %v1933
    %v1935 = vmul.f32 %v1932, %v1933
    %v1936 = vld [vmem:[%s2 + $0x20] sm:$0xf]
    %v1937 = vld [vmem:[%s2 + $0x24] sm:$0xf]
    %v1938 = vld [vmem:[%s2 + $0x28] sm:$0xf]
    %v1939 = vld [vmem:[%s2 + $0x2c] sm:$0xf]
    %v1940 = vld [vmem:[%s2 + $0x30] sm:$0xf]
    %v1941 = vld [vmem:[%s2 + $0x34] sm:$0xf]
    %v1942 = vld [vmem:[%s2 + $0x38] sm:$0xf]
    %v1943 = vld [vmem:[%s2 + $0x3c] sm:$0xf]
    %v1944 = vpack.c.bf16 %v1934, %v1934
    %v1945 = vpack.c.bf16 %v1935, %v1935
    %v1946 = vld [vmem:[%s1 + $0x6] ss:$0 sm:$0xff]
    %v1949 = vunpack.c.l.b16 %v1944
    %v1950 = vunpack.c.l.b16 %v1945
    %vm1951 = vcmask 1041409
    %v1952 = vsel %vm1951, %v1950, %v1949
    %v1953 = vpack.c.b16 %v1952, %v1952
    %v1962 = vunpack.c.l.b16 %v1936
    %v1963 = vunpack.c.l.b16 %v1937
    %v1964 = vunpack.c.l.b16 %v1938
    %v1965 = vunpack.c.l.b16 %v1939
    %v1966 = vunpack.c.l.b16 %v1940
    %v1967 = vunpack.c.l.b16 %v1941
    %v1968 = vunpack.c.l.b16 %v1942
    %v1969 = vunpack.c.l.b16 %v1943
    %v1970 = vpack.c.b16 %v1963, %v1962
    %v1971 = vpack.c.b16 %v1965, %v1964
    %v1972 = vpack.c.b16 %v1967, %v1966
    %v1973 = vpack.c.b16 %v1969, %v1968
    %v1979 = vsel %vm618, %v1953, 0
    %1981 = vmatprep.subr.bf16.mxu0 0
    %1982 = vmatpush1.bf16.msra.mxu0 0
    %1983 = vmatprep.subr.bf16.mxu0 0
    %1984 = vmatpush1.bf16.msra.mxu0 0
    %1985 = vmatprep.subr.bf16.mxu0 0
    %1986 = vmatpush1.bf16.msra.mxu0 0
    %1987 = vmatprep.subr.bf16.mxu0 0
    %1988 = vmatpush1.bf16.msra.mxu0 0
    %1989 = vmatprep.subr.bf16.mxu0 0
    %1990 = vmatpush1.bf16.msra.mxu0 %v1973
    %1991 = vmatprep.subr.bf16.mxu0 0
    %1992 = vmatpush1.bf16.msra.mxu0 %v1972
    %1993 = vmatprep.subr.bf16.mxu0 0
    %1994 = vmatpush1.bf16.msra.mxu0 %v1971
    %1995 = vmatprep.subr.bf16.mxu0 0
    %1996 = vmatpush1.bf16.msra.mxu0 %v1970
    %1997 = vmatprep.subr.bf16.mxu0 0
    %1998 = vmatpush2.bf16.msra.mxu0 0
    %1999 = vmatprep.subr.bf16.mxu0 0
    %2000 = vmatpush2.bf16.msra.mxu0 0
    %2001 = vmatprep.subr.bf16.mxu0 0
    %2002 = vmatpush2.bf16.msra.mxu0 0
    %2003 = vmatprep.subr.bf16.mxu0 0
    %2004 = vmatpush2.bf16.msra.mxu0 0
    %2005 = vmatprep.subr.bf16.mxu0 0
    %2006 = vmatpush2.bf16.msra.mxu0 0
    %2007 = vmatprep.subr.bf16.mxu0 0
    %2008 = vmatpush2.bf16.msra.mxu0 0
    %2009 = vmatprep.subr.bf16.mxu0 0
    %2010 = vmatpush2.bf16.msra.mxu0 0
    %2011 = vmatprep.subr.bf16.mxu0 0
    %2012 = vmatpush2.bf16.msra.mxu0 0
    %2013 = vmatprep.mubr.bf16.mxu0 0
    %2014 = vmatmul.mubr.bf16.gmra.mxu0 %v1979
    %v2015 = vpop.f32.mrf.mxu0
    %v2016 = vadd.f32 %v1946, %v2015
    %v2017 = vpop.f32.mrf.mxu0
    %v2018 = vpop.f32.mrf.mxu0
    %v2019 = vpop.f32.mrf.mxu0
    %2020 = vdwg.mxu0
    %v2021 = vxor.u32 %v2016, 2147483648
    %v2022 = vmul.f32 %v2021, 1.442695
    %v2023 = vpow.pop %v2022
    %v2024 = vadd.f32 %v2023, 1.0
    %v2025 = vrcp.pop %v2024
    %v2026 = vmul.f32 1.0, %v2025
    %v2027 = vmul.f32 %v2016, %v2026
    %v2028 = vld [vmem:[%s2 + $0x40] sm:$0xf]
    %v2029 = vpack.c.bf16 %v2027, %v2027
    %v2030 = vld [vmem:[%s1 + $0x7] ss:$0 sm:$0xff]
    %vm2031 = vcmask 64512
    %v2033 = vsel %vm2031, %v2029, 0
    %vm2035 = vcmask 1043456
    %v2037 = vsel %vm2035, %v2028, 0
    %2039 = vmatprep.subr.bf16.mxu0 0
    %2040 = vmatpush1.bf16.msra.mxu0 0
    %2041 = vmatprep.subr.bf16.mxu0 0
    %2042 = vmatpush1.bf16.msra.mxu0 0
    %2043 = vmatprep.subr.bf16.mxu0 0
    %2044 = vmatpush1.bf16.msra.mxu0 0
    %2045 = vmatprep.subr.bf16.mxu0 0
    %2046 = vmatpush1.bf16.msra.mxu0 0
    %2047 = vmatprep.subr.bf16.mxu0 0
    %2048 = vmatpush1.bf16.msra.mxu0 0
    %2049 = vmatprep.subr.bf16.mxu0 0
    %2050 = vmatpush1.bf16.msra.mxu0 0
    %2051 = vmatprep.subr.bf16.mxu0 0
    %2052 = vmatpush1.bf16.msra.mxu0 0
    %2053 = vmatprep.subr.bf16.mxu0 0
    %2054 = vmatpush1.bf16.msra.mxu0 %v2037
    %2055 = vmatprep.subr.bf16.mxu0 0
    %2056 = vmatpush2.bf16.msra.mxu0 0
    %2057 = vmatprep.subr.bf16.mxu0 0
    %2058 = vmatpush2.bf16.msra.mxu0 0
    %2059 = vmatprep.subr.bf16.mxu0 0
    %2060 = vmatpush2.bf16.msra.mxu0 0
    %2061 = vmatprep.subr.bf16.mxu0 0
    %2062 = vmatpush2.bf16.msra.mxu0 0
    %2063 = vmatprep.subr.bf16.mxu0 0
    %2064 = vmatpush2.bf16.msra.mxu0 0
    %2065 = vmatprep.subr.bf16.mxu0 0
    %2066 = vmatpush2.bf16.msra.mxu0 0
    %2067 = vmatprep.subr.bf16.mxu0 0
    %2068 = vmatpush2.bf16.msra.mxu0 0
    %2069 = vmatprep.subr.bf16.mxu0 0
    %2070 = vmatpush2.bf16.msra.mxu0 0
    %2071 = vmatprep.mubr.bf16.mxu0 0
    %2072 = vmatmul.mubr.bf16.gmra.mxu0 %v2033
    %v2073 = vpop.f32.mrf.mxu0
    %v2074 = vadd.f32 %v2030, %v2073
    %v2075 = vpop.f32.mrf.mxu0
    %v2076 = vpop.f32.mrf.mxu0
    %v2077 = vpop.f32.mrf.mxu0
    %2078 = vdwg.mxu0
    %v2079 = vxor.u32 %v2074, 2147483648
    %v2080 = vmul.f32 %v2079, 1.442695
    %v2081 = vpow.pop %v2080
    %v2082 = vadd.f32 %v2081, 1.0
    %v2083 = vrcp.pop %v2082
    %v2084 = vmul.f32 1.0, %v2083
    %v2087 = vunpack.c.l.s4 1966171168
    %v2088 = vunpack.c.0.s8 %v2087
    %v2089 = vlaneseq
    %v2090 = vshrl.u32 %v2089, 7
    %v2091 = vsub.s32 %v2088, %v2090
    %v2092 = vrot.slane %v2084, %v2091
    %v2093 = vcombine.high %v2092, %v2092
    %v2095 = vunpack.c.l.s4 1966171168
    %v2096 = vunpack.c.0.s8 %v2095
    %v2097 = vlaneseq
    %v2098 = vshrl.u32 %v2097, 7
    %v2099 = vsub.s32 %v2096, %v2098
    %v2100 = vrot.slane %v2092, %v2099
    %v2102 = vunpack.c.l.s4 1966171168
    %v2103 = vunpack.c.0.s8 %v2102
    %v2104 = vlaneseq
    %v2105 = vshrl.u32 %v2104, 7
    %v2106 = vsub.s32 %v2103, %v2105
    %v2107 = vrot.slane %v2093, %v2106
    %v2108 = vlaneseq
    %v2109 = vshrl.u32 %v2108, 7
    %v2110 = vsub.s32 0, %v2109
    %v2111 = vrot.slane %v2100, %v2110
    %v2112 = vlaneseq
    %v2113 = vshrl.u32 %v2112, 7
    %v2114 = vsub.s32 0, %v2113
    %v2115 = vrot.slane %v2107, %v2114
    %v2118 = vmul.f32 %v1875, %v2111
    %v2119 = vmul.f32 %v1876, %v2111
    %v2120 = vmul.f32 %v1877, %v2111
    %v2121 = vmul.f32 %v1878, %v2111
    %v2122 = vmul.f32 %v1879, %v2111
    %v2123 = vmul.f32 %v1880, %v2111
    %v2124 = vmul.f32 %v1881, %v2111
    %v2125 = vmul.f32 %v1882, %v2111
    %v2126 = vmul.f32 %v1883, %v2115
    %v2127 = vmul.f32 %v1884, %v2115
    %v2128 = vmul.f32 %v1885, %v2115
    %v2129 = vmul.f32 %v1886, %v2115
    %v2130 = vmul.f32 %v1887, %v2115
    %v2131 = vmul.f32 %v1888, %v2115
    %v2132 = vmul.f32 %v1889, %v2115
    %v2133 = vmul.f32 %v1890, %v2115
    %v2134 = vld [vmem:[%s2 + $0x48] sm:$0xf]
    %v2135 = vld [vmem:[%s2 + $0x4c] sm:$0xf]
    %v2136 = vld [vmem:[%s2 + $0x50] sm:$0xf]
    %v2137 = vld [vmem:[%s2 + $0x54] sm:$0xf]
    %v2138 = vld [vmem:[%s2 + $0x58] sm:$0xf]
    %v2139 = vld [vmem:[%s2 + $0x5c] sm:$0xf]
    %v2140 = vld [vmem:[%s2 + $0x60] sm:$0xf]
    %v2141 = vld [vmem:[%s2 + $0x64] sm:$0xf]
    %v2142 = vpack.c.bf16 %v2119, %v2118
    %v2143 = vpack.c.bf16 %v2121, %v2120
    %v2144 = vpack.c.bf16 %v2123, %v2122
    %v2145 = vpack.c.bf16 %v2125, %v2124
    %v2146 = vpack.c.bf16 %v2127, %v2126
    %v2147 = vpack.c.bf16 %v2129, %v2128
    %v2148 = vpack.c.bf16 %v2131, %v2130
    %v2149 = vpack.c.bf16 %v2133, %v2132
    %v2158 = vunpack.c.l.b16 %v2134
    %v2159 = vunpack.c.l.b16 %v2135
    %v2160 = vunpack.c.l.b16 %v2136
    %v2161 = vunpack.c.l.b16 %v2137
    %v2162 = vunpack.c.l.b16 %v2138
    %v2163 = vunpack.c.l.b16 %v2139
    %v2164 = vunpack.c.l.b16 %v2140
    %v2165 = vunpack.c.l.b16 %v2141
    %v2166 = vpack.c.b16 %v2159, %v2158
    %v2167 = vpack.c.b16 %v2161, %v2160
    %v2168 = vpack.c.b16 %v2163, %v2162
    %v2169 = vpack.c.b16 %v2165, %v2164
    %v2175 = vsel %vm618, %v2142, 0
    %v2178 = vsel %vm618, %v2143, 0
    %v2181 = vsel %vm618, %v2144, 0
    %v2184 = vsel %vm618, %v2145, 0
    %v2187 = vsel %vm618, %v2146, 0
    %v2190 = vsel %vm618, %v2147, 0
    %v2193 = vsel %vm618, %v2148, 0
    %v2196 = vsel %vm618, %v2149, 0
    %2198 = vmatprep.subr.bf16.mxu0 0
    %2199 = vmatpush1.bf16.msra.mxu0 0
    %2200 = vmatprep.subr.bf16.mxu0 0
    %2201 = vmatpush1.bf16.msra.mxu0 0
    %2202 = vmatprep.subr.bf16.mxu0 0
    %2203 = vmatpush1.bf16.msra.mxu0 0
    %2204 = vmatprep.subr.bf16.mxu0 0
    %2205 = vmatpush1.bf16.msra.mxu0 0
    %2206 = vmatprep.subr.bf16.mxu0 0
    %2207 = vmatpush1.bf16.msra.mxu0 %v2169
    %2208 = vmatprep.subr.bf16.mxu0 0
    %2209 = vmatpush1.bf16.msra.mxu0 %v2168
    %2210 = vmatprep.subr.bf16.mxu0 0
    %2211 = vmatpush1.bf16.msra.mxu0 %v2167
    %2212 = vmatprep.subr.bf16.mxu0 0
    %2213 = vmatpush1.bf16.msra.mxu0 %v2166
    %2214 = vmatprep.subr.bf16.mxu0 0
    %2215 = vmatpush2.bf16.msra.mxu0 0
    %2216 = vmatprep.subr.bf16.mxu0 0
    %2217 = vmatpush2.bf16.msra.mxu0 0
    %2218 = vmatprep.subr.bf16.mxu0 0
    %2219 = vmatpush2.bf16.msra.mxu0 0
    %2220 = vmatprep.subr.bf16.mxu0 0
    %2221 = vmatpush2.bf16.msra.mxu0 0
    %2222 = vmatprep.subr.bf16.mxu0 0
    %2223 = vmatpush2.bf16.msra.mxu0 0
    %2224 = vmatprep.subr.bf16.mxu0 0
    %2225 = vmatpush2.bf16.msra.mxu0 0
    %2226 = vmatprep.subr.bf16.mxu0 0
    %2227 = vmatpush2.bf16.msra.mxu0 0
    %2228 = vmatprep.subr.bf16.mxu0 0
    %2229 = vmatpush2.bf16.msra.mxu0 0
    %2230 = vmatprep.mubr.bf16.mxu0 0
    %2231 = vmatmul.mubr.bf16.gmra.mxu0 %v2175
    %v2232 = vpop.f32.mrf.mxu0
    %v2233 = vadd.f32 0.0, %v2232
    %v2234 = vpop.f32.mrf.mxu0
    %v2235 = vpop.f32.mrf.mxu0
    %v2236 = vadd.f32 0.0, %v2235
    %v2237 = vpop.f32.mrf.mxu0
    %2238 = vmatprep.mubr.bf16.mxu0 0
    %2239 = vmatmul.mubr.bf16.gmra.mxu0 %v2178
    %v2240 = vpop.f32.mrf.mxu0
    %v2241 = vadd.f32 0.0, %v2240
    %v2242 = vpop.f32.mrf.mxu0
    %v2243 = vpop.f32.mrf.mxu0
    %v2244 = vadd.f32 0.0, %v2243
    %v2245 = vpop.f32.mrf.mxu0
    %2246 = vmatprep.mubr.bf16.mxu0 0
    %2247 = vmatmul.mubr.bf16.gmra.mxu0 %v2181
    %v2248 = vpop.f32.mrf.mxu0
    %v2249 = vadd.f32 0.0, %v2248
    %v2250 = vpop.f32.mrf.mxu0
    %v2251 = vpop.f32.mrf.mxu0
    %v2252 = vadd.f32 0.0, %v2251
    %v2253 = vpop.f32.mrf.mxu0
    %2254 = vmatprep.mubr.bf16.mxu0 0
    %2255 = vmatmul.mubr.bf16.gmra.mxu0 %v2184
    %v2256 = vpop.f32.mrf.mxu0
    %v2257 = vadd.f32 0.0, %v2256
    %v2258 = vpop.f32.mrf.mxu0
    %v2259 = vpop.f32.mrf.mxu0
    %v2260 = vadd.f32 0.0, %v2259
    %v2261 = vpop.f32.mrf.mxu0
    %2262 = vmatprep.mubr.bf16.mxu0 0
    %2263 = vmatmul.mubr.bf16.gmra.mxu0 %v2187
    %v2264 = vpop.f32.mrf.mxu0
    %v2265 = vadd.f32 0.0, %v2264
    %v2266 = vpop.f32.mrf.mxu0
    %v2267 = vpop.f32.mrf.mxu0
    %v2268 = vadd.f32 0.0, %v2267
    %v2269 = vpop.f32.mrf.mxu0
    %2270 = vmatprep.mubr.bf16.mxu0 0
    %2271 = vmatmul.mubr.bf16.gmra.mxu0 %v2190
    %v2272 = vpop.f32.mrf.mxu0
    %v2273 = vadd.f32 0.0, %v2272
    %v2274 = vpop.f32.mrf.mxu0
    %v2275 = vpop.f32.mrf.mxu0
    %v2276 = vadd.f32 0.0, %v2275
    %v2277 = vpop.f32.mrf.mxu0
    %2278 = vmatprep.mubr.bf16.mxu0 0
    %2279 = vmatmul.mubr.bf16.gmra.mxu0 %v2193
    %v2280 = vpop.f32.mrf.mxu0
    %v2281 = vadd.f32 0.0, %v2280
    %v2282 = vpop.f32.mrf.mxu0
    %v2283 = vpop.f32.mrf.mxu0
    %v2284 = vadd.f32 0.0, %v2283
    %v2285 = vpop.f32.mrf.mxu0
    %2286 = vmatprep.mubr.bf16.mxu0 0
    %2287 = vmatmul.mubr.bf16.gmra.mxu0 %v2196
    %v2288 = vpop.f32.mrf.mxu0
    %v2289 = vadd.f32 0.0, %v2288
    %v2290 = vpop.f32.mrf.mxu0
    %v2291 = vpop.f32.mrf.mxu0
    %v2292 = vadd.f32 0.0, %v2291
    %v2293 = vpop.f32.mrf.mxu0
    %2294 = vdwg.mxu0
    %v2295 = vld [vmem:[%s1 + $0x20] ss:$0 sm:$0xff]
    %v2296 = vmul.f32 %v2233, %v2295
    %v2297 = vmul.f32 %v2236, %v2295
    %v2298 = vmul.f32 %v2241, %v2295
    %v2299 = vmul.f32 %v2244, %v2295
    %v2300 = vmul.f32 %v2249, %v2295
    %v2301 = vmul.f32 %v2252, %v2295
    %v2302 = vmul.f32 %v2257, %v2295
    %v2303 = vmul.f32 %v2260, %v2295
    %v2304 = vmul.f32 %v2265, %v2295
    %v2305 = vmul.f32 %v2268, %v2295
    %v2306 = vmul.f32 %v2273, %v2295
    %v2307 = vmul.f32 %v2276, %v2295
    %v2308 = vmul.f32 %v2281, %v2295
    %v2309 = vmul.f32 %v2284, %v2295
    %v2310 = vmul.f32 %v2289, %v2295
    %v2311 = vmul.f32 %v2292, %v2295
    %v2312 = vld [vmem:[%s1 + $0x21] ss:$0 sm:$0xff]
    %v2313 = vadd.f32 %v2296, %v2312
    %v2314 = vadd.f32 %v2297, %v2312
    %v2315 = vadd.f32 %v2298, %v2312
    %v2316 = vadd.f32 %v2299, %v2312
    %v2317 = vadd.f32 %v2300, %v2312
    %v2318 = vadd.f32 %v2301, %v2312
    %v2319 = vadd.f32 %v2302, %v2312
    %v2320 = vadd.f32 %v2303, %v2312
    %v2321 = vadd.f32 %v2304, %v2312
    %v2322 = vadd.f32 %v2305, %v2312
    %v2323 = vadd.f32 %v2306, %v2312
    %v2324 = vadd.f32 %v2307, %v2312
    %v2325 = vadd.f32 %v2308, %v2312
    %v2326 = vadd.f32 %v2309, %v2312
    %v2327 = vadd.f32 %v2310, %v2312
    %v2328 = vadd.f32 %v2311, %v2312
    %v2329 = vadd.f32 %v2313, %v311
    %v2330 = vadd.f32 %v2314, %v312
    %v2331 = vadd.f32 %v2315, %v313
    %v2332 = vadd.f32 %v2316, %v314
    %v2333 = vadd.f32 %v2317, %v315
    %v2334 = vadd.f32 %v2318, %v316
    %v2335 = vadd.f32 %v2319, %v317
    %v2336 = vadd.f32 %v2320, %v318
    %v2337 = vadd.f32 %v2321, %v319
    %v2338 = vadd.f32 %v2322, %v320
    %v2339 = vadd.f32 %v2323, %v321
    %v2340 = vadd.f32 %v2324, %v322
    %v2341 = vadd.f32 %v2325, %v323
    %v2342 = vadd.f32 %v2326, %v324
    %v2343 = vadd.f32 %v2327, %v325
    %v2344 = vadd.f32 %v2328, %v326
    %v2345 = vld [vmem:[%s2 + $0x68] sm:$0xf]
    %v2346 = vld [vmem:[%s2 + $0x6c] sm:$0xf]
    %v2347 = vld [vmem:[%s2 + $0x70] sm:$0xf]
    %v2348 = vld [vmem:[%s2 + $0x74] sm:$0xf]
    %v2349 = vpack.c.bf16 %v2330, %v2329
    %v2350 = vpack.c.bf16 %v2332, %v2331
    %v2351 = vpack.c.bf16 %v2334, %v2333
    %v2352 = vpack.c.bf16 %v2336, %v2335
    %v2353 = vpack.c.bf16 %v2338, %v2337
    %v2354 = vpack.c.bf16 %v2340, %v2339
    %v2355 = vpack.c.bf16 %v2342, %v2341
    %v2356 = vpack.c.bf16 %v2344, %v2343
    %v2361 = vunpack.c.l.b16 %v2345
    %v2362 = vunpack.c.l.b16 %v2346
    %v2363 = vunpack.c.l.b16 %v2347
    %v2364 = vunpack.c.l.b16 %v2348
    %v2365 = vpack.c.b16 %v2362, %v2361
    %v2366 = vpack.c.b16 %v2364, %v2363
    %v2370 = vsel %vm59, %v2349, 0
    %v2373 = vsel %vm59, %v2350, 0
    %v2376 = vsel %vm59, %v2351, 0
    %v2379 = vsel %vm59, %v2352, 0
    %v2382 = vsel %vm59, %v2353, 0
    %v2385 = vsel %vm59, %v2354, 0
    %v2388 = vsel %vm59, %v2355, 0
    %v2391 = vsel %vm59, %v2356, 0
    %2393 = vmatprep.subr.bf16.mxu0 0
    %2394 = vmatpush1.bf16.msra.mxu0 0
    %2395 = vmatprep.subr.bf16.mxu0 0
    %2396 = vmatpush1.bf16.msra.mxu0 0
    %2397 = vmatprep.subr.bf16.mxu0 0
    %2398 = vmatpush1.bf16.msra.mxu0 0
    %2399 = vmatprep.subr.bf16.mxu0 0
    %2400 = vmatpush1.bf16.msra.mxu0 0
    %2401 = vmatprep.subr.bf16.mxu0 0
    %2402 = vmatpush1.bf16.msra.mxu0 0
    %2403 = vmatprep.subr.bf16.mxu0 0
    %2404 = vmatpush1.bf16.msra.mxu0 0
    %2405 = vmatprep.subr.bf16.mxu0 0
    %2406 = vmatpush1.bf16.msra.mxu0 %v2366
    %2407 = vmatprep.subr.bf16.mxu0 0
    %2408 = vmatpush1.bf16.msra.mxu0 %v2365
    %2409 = vmatprep.subr.bf16.mxu0 0
    %2410 = vmatpush2.bf16.msra.mxu0 0
    %2411 = vmatprep.subr.bf16.mxu0 0
    %2412 = vmatpush2.bf16.msra.mxu0 0
    %2413 = vmatprep.subr.bf16.mxu0 0
    %2414 = vmatpush2.bf16.msra.mxu0 0
    %2415 = vmatprep.subr.bf16.mxu0 0
    %2416 = vmatpush2.bf16.msra.mxu0 0
    %2417 = vmatprep.subr.bf16.mxu0 0
    %2418 = vmatpush2.bf16.msra.mxu0 0
    %2419 = vmatprep.subr.bf16.mxu0 0
    %2420 = vmatpush2.bf16.msra.mxu0 0
    %2421 = vmatprep.subr.bf16.mxu0 0
    %2422 = vmatpush2.bf16.msra.mxu0 0
    %2423 = vmatprep.subr.bf16.mxu0 0
    %2424 = vmatpush2.bf16.msra.mxu0 0
    %2425 = vmatprep.mubr.bf16.mxu0 0
    %2426 = vmatmul.mubr.bf16.gmra.mxu0 %v2370
    %v2427 = vpop.f32.mrf.mxu0
    %v2428 = vadd.f32 0.0, %v2427
    %v2429 = vpop.f32.mrf.mxu0
    %v2430 = vpop.f32.mrf.mxu0
    %v2431 = vadd.f32 0.0, %v2430
    %v2432 = vpop.f32.mrf.mxu0
    %2433 = vmatprep.mubr.bf16.mxu0 0
    %2434 = vmatmul.mubr.bf16.gmra.mxu0 %v2373
    %v2435 = vpop.f32.mrf.mxu0
    %v2436 = vadd.f32 0.0, %v2435
    %v2437 = vpop.f32.mrf.mxu0
    %v2438 = vpop.f32.mrf.mxu0
    %v2439 = vadd.f32 0.0, %v2438
    %v2440 = vpop.f32.mrf.mxu0
    %2441 = vmatprep.mubr.bf16.mxu0 0
    %2442 = vmatmul.mubr.bf16.gmra.mxu0 %v2376
    %v2443 = vpop.f32.mrf.mxu0
    %v2444 = vadd.f32 0.0, %v2443
    %v2445 = vpop.f32.mrf.mxu0
    %v2446 = vpop.f32.mrf.mxu0
    %v2447 = vadd.f32 0.0, %v2446
    %v2448 = vpop.f32.mrf.mxu0
    %2449 = vmatprep.mubr.bf16.mxu0 0
    %2450 = vmatmul.mubr.bf16.gmra.mxu0 %v2379
    %v2451 = vpop.f32.mrf.mxu0
    %v2452 = vadd.f32 0.0, %v2451
    %v2453 = vpop.f32.mrf.mxu0
    %v2454 = vpop.f32.mrf.mxu0
    %v2455 = vadd.f32 0.0, %v2454
    %v2456 = vpop.f32.mrf.mxu0
    %2457 = vmatprep.mubr.bf16.mxu0 0
    %2458 = vmatmul.mubr.bf16.gmra.mxu0 %v2382
    %v2459 = vpop.f32.mrf.mxu0
    %v2460 = vadd.f32 0.0, %v2459
    %v2461 = vpop.f32.mrf.mxu0
    %v2462 = vpop.f32.mrf.mxu0
    %v2463 = vadd.f32 0.0, %v2462
    %v2464 = vpop.f32.mrf.mxu0
    %2465 = vmatprep.mubr.bf16.mxu0 0
    %2466 = vmatmul.mubr.bf16.gmra.mxu0 %v2385
    %v2467 = vpop.f32.mrf.mxu0
    %v2468 = vadd.f32 0.0, %v2467
    %v2469 = vpop.f32.mrf.mxu0
    %v2470 = vpop.f32.mrf.mxu0
    %v2471 = vadd.f32 0.0, %v2470
    %v2472 = vpop.f32.mrf.mxu0
    %2473 = vmatprep.mubr.bf16.mxu0 0
    %2474 = vmatmul.mubr.bf16.gmra.mxu0 %v2388
    %v2475 = vpop.f32.mrf.mxu0
    %v2476 = vadd.f32 0.0, %v2475
    %v2477 = vpop.f32.mrf.mxu0
    %v2478 = vpop.f32.mrf.mxu0
    %v2479 = vadd.f32 0.0, %v2478
    %v2480 = vpop.f32.mrf.mxu0
    %2481 = vmatprep.mubr.bf16.mxu0 0
    %2482 = vmatmul.mubr.bf16.gmra.mxu0 %v2391
    %v2483 = vpop.f32.mrf.mxu0
    %v2484 = vadd.f32 0.0, %v2483
    %v2485 = vpop.f32.mrf.mxu0
    %v2486 = vpop.f32.mrf.mxu0
    %v2487 = vadd.f32 0.0, %v2486
    %v2488 = vpop.f32.mrf.mxu0
    %2489 = vdwg.mxu0
    %v2490 = vld [vmem:[%s1 + $0x22] ss:$0 sm:$0xff]
    %v2491 = vmul.f32 %v2428, %v2490
    %v2492 = vmul.f32 %v2431, %v2490
    %v2493 = vmul.f32 %v2436, %v2490
    %v2494 = vmul.f32 %v2439, %v2490
    %v2495 = vmul.f32 %v2444, %v2490
    %v2496 = vmul.f32 %v2447, %v2490
    %v2497 = vmul.f32 %v2452, %v2490
    %v2498 = vmul.f32 %v2455, %v2490
    %v2499 = vmul.f32 %v2460, %v2490
    %v2500 = vmul.f32 %v2463, %v2490
    %v2501 = vmul.f32 %v2468, %v2490
    %v2502 = vmul.f32 %v2471, %v2490
    %v2503 = vmul.f32 %v2476, %v2490
    %v2504 = vmul.f32 %v2479, %v2490
    %v2505 = vmul.f32 %v2484, %v2490
    %v2506 = vmul.f32 %v2487, %v2490
    %v2507 = vld [vmem:[%s1 + $0x23] ss:$0 sm:$0xff]
    %v2508 = vadd.f32 %v2491, %v2507
    %v2509 = vadd.f32 %v2492, %v2507
    %v2510 = vadd.f32 %v2493, %v2507
    %v2511 = vadd.f32 %v2494, %v2507
    %v2512 = vadd.f32 %v2495, %v2507
    %v2513 = vadd.f32 %v2496, %v2507
    %v2514 = vadd.f32 %v2497, %v2507
    %v2515 = vadd.f32 %v2498, %v2507
    %v2516 = vadd.f32 %v2499, %v2507
    %v2517 = vadd.f32 %v2500, %v2507
    %v2518 = vadd.f32 %v2501, %v2507
    %v2519 = vadd.f32 %v2502, %v2507
    %v2520 = vadd.f32 %v2503, %v2507
    %v2521 = vadd.f32 %v2504, %v2507
    %v2522 = vadd.f32 %v2505, %v2507
    %v2523 = vadd.f32 %v2506, %v2507
    %v2524 = vxor.u32 %v2508, 2147483648
    %v2525 = vxor.u32 %v2509, 2147483648
    %v2526 = vxor.u32 %v2510, 2147483648
    %v2527 = vxor.u32 %v2511, 2147483648
    %v2528 = vxor.u32 %v2512, 2147483648
    %v2529 = vxor.u32 %v2513, 2147483648
    %v2530 = vxor.u32 %v2514, 2147483648
    %v2531 = vxor.u32 %v2515, 2147483648
    %v2532 = vxor.u32 %v2516, 2147483648
    %v2533 = vxor.u32 %v2517, 2147483648
    %v2534 = vxor.u32 %v2518, 2147483648
    %v2535 = vxor.u32 %v2519, 2147483648
    %v2536 = vxor.u32 %v2520, 2147483648
    %v2537 = vxor.u32 %v2521, 2147483648
    %v2538 = vxor.u32 %v2522, 2147483648
    %v2539 = vxor.u32 %v2523, 2147483648
    %v2540 = vmul.f32 %v2524, 1.442695
    %v2541 = vpow.pop %v2540
    %v2542 = vmul.f32 %v2525, 1.442695
    %v2543 = vpow.pop %v2542
    %v2544 = vmul.f32 %v2526, 1.442695
    %v2545 = vpow.pop %v2544
    %v2546 = vmul.f32 %v2527, 1.442695
    %v2547 = vpow.pop %v2546
    %v2548 = vmul.f32 %v2528, 1.442695
    %v2549 = vpow.pop %v2548
    %v2550 = vmul.f32 %v2529, 1.442695
    %v2551 = vpow.pop %v2550
    %v2552 = vmul.f32 %v2530, 1.442695
    %v2553 = vpow.pop %v2552
    %v2554 = vmul.f32 %v2531, 1.442695
    %v2555 = vpow.pop %v2554
    %v2556 = vmul.f32 %v2532, 1.442695
    %v2557 = vpow.pop %v2556
    %v2558 = vmul.f32 %v2533, 1.442695
    %v2559 = vpow.pop %v2558
    %v2560 = vmul.f32 %v2534, 1.442695
    %v2561 = vpow.pop %v2560
    %v2562 = vmul.f32 %v2535, 1.442695
    %v2563 = vpow.pop %v2562
    %v2564 = vmul.f32 %v2536, 1.442695
    %v2565 = vpow.pop %v2564
    %v2566 = vmul.f32 %v2537, 1.442695
    %v2567 = vpow.pop %v2566
    %v2568 = vmul.f32 %v2538, 1.442695
    %v2569 = vpow.pop %v2568
    %v2570 = vmul.f32 %v2539, 1.442695
    %v2571 = vpow.pop %v2570
    %v2572 = vadd.f32 %v2541, 1.0
    %v2573 = vadd.f32 %v2543, 1.0
    %v2574 = vadd.f32 %v2545, 1.0
    %v2575 = vadd.f32 %v2547, 1.0
    %v2576 = vadd.f32 %v2549, 1.0
    %v2577 = vadd.f32 %v2551, 1.0
    %v2578 = vadd.f32 %v2553, 1.0
    %v2579 = vadd.f32 %v2555, 1.0
    %v2580 = vadd.f32 %v2557, 1.0
    %v2581 = vadd.f32 %v2559, 1.0
    %v2582 = vadd.f32 %v2561, 1.0
    %v2583 = vadd.f32 %v2563, 1.0
    %v2584 = vadd.f32 %v2565, 1.0
    %v2585 = vadd.f32 %v2567, 1.0
    %v2586 = vadd.f32 %v2569, 1.0
    %v2587 = vadd.f32 %v2571, 1.0
    %v2588 = vrcp.pop %v2572
    %v2589 = vmul.f32 1.0, %v2588
    %v2590 = vrcp.pop %v2573
    %v2591 = vmul.f32 1.0, %v2590
    %v2592 = vrcp.pop %v2574
    %v2593 = vmul.f32 1.0, %v2592
    %v2594 = vrcp.pop %v2575
    %v2595 = vmul.f32 1.0, %v2594
    %v2596 = vrcp.pop %v2576
    %v2597 = vmul.f32 1.0, %v2596
    %v2598 = vrcp.pop %v2577
    %v2599 = vmul.f32 1.0, %v2598
    %v2600 = vrcp.pop %v2578
    %v2601 = vmul.f32 1.0, %v2600
    %v2602 = vrcp.pop %v2579
    %v2603 = vmul.f32 1.0, %v2602
    %v2604 = vrcp.pop %v2580
    %v2605 = vmul.f32 1.0, %v2604
    %v2606 = vrcp.pop %v2581
    %v2607 = vmul.f32 1.0, %v2606
    %v2608 = vrcp.pop %v2582
    %v2609 = vmul.f32 1.0, %v2608
    %v2610 = vrcp.pop %v2583
    %v2611 = vmul.f32 1.0, %v2610
    %v2612 = vrcp.pop %v2584
    %v2613 = vmul.f32 1.0, %v2612
    %v2614 = vrcp.pop %v2585
    %v2615 = vmul.f32 1.0, %v2614
    %v2616 = vrcp.pop %v2586
    %v2617 = vmul.f32 1.0, %v2616
    %v2618 = vrcp.pop %v2587
    %v2619 = vmul.f32 1.0, %v2618
    %v2620 = vmul.f32 %v2508, %v2589
    %v2621 = vmul.f32 %v2509, %v2591
    %v2622 = vmul.f32 %v2510, %v2593
    %v2623 = vmul.f32 %v2511, %v2595
    %v2624 = vmul.f32 %v2512, %v2597
    %v2625 = vmul.f32 %v2513, %v2599
    %v2626 = vmul.f32 %v2514, %v2601
    %v2627 = vmul.f32 %v2515, %v2603
    %v2628 = vmul.f32 %v2516, %v2605
    %v2629 = vmul.f32 %v2517, %v2607
    %v2630 = vmul.f32 %v2518, %v2609
    %v2631 = vmul.f32 %v2519, %v2611
    %v2632 = vmul.f32 %v2520, %v2613
    %v2633 = vmul.f32 %v2521, %v2615
    %v2634 = vmul.f32 %v2522, %v2617
    %v2635 = vmul.f32 %v2523, %v2619
    %v2636 = vadd.f32 %v2620, %v2621
    %v2637 = vadd.f32 %v2636, %v2622
    %v2638 = vadd.f32 %v2637, %v2623
    %v2639 = vadd.f32 %v2638, %v2624
    %v2640 = vadd.f32 %v2639, %v2625
    %v2641 = vadd.f32 %v2640, %v2626
    %v2642 = vadd.f32 %v2641, %v2627
    %v2643 = vrot.slane %v2642, 4
    %v2644 = vadd.f32 %v2642, %v2643
    %v2645 = vrot.slane %v2644, 2
    %v2646 = vadd.f32 %v2644, %v2645
    %v2647 = vrot.slane %v2646, 1
    %v2648 = vadd.f32 %v2646, %v2647
    %v2649 = vadd.f32 %v2628, %v2629
    %v2650 = vadd.f32 %v2649, %v2630
    %v2651 = vadd.f32 %v2650, %v2631
    %v2652 = vadd.f32 %v2651, %v2632
    %v2653 = vadd.f32 %v2652, %v2633
    %v2654 = vadd.f32 %v2653, %v2634
    %v2655 = vadd.f32 %v2654, %v2635
    %v2656 = vrot.slane %v2655, 4
    %v2657 = vadd.f32 %v2655, %v2656
    %v2658 = vrot.slane %v2657, 2
    %v2659 = vadd.f32 %v2657, %v2658
    %v2660 = vrot.slane %v2659, 1
    %v2661 = vadd.f32 %v2659, %v2660
    %v2662 = vmul.f32 %v2648, %v1933
    %v2663 = vmul.f32 %v2661, %v1933
    %v2664 = vld [vmem:[%s3] sm:$0xff]
    %v2665 = vld [vmem:[%s3 + $0x8] sm:$0xff]
    %v2666 = vld [vmem:[%s3 + $0x10] sm:$0xff]
    %v2667 = vld [vmem:[%s3 + $0x18] sm:$0xff]
    %v2668 = vld [vmem:[%s3 + $0x20] sm:$0xff]
    %v2669 = vld [vmem:[%s3 + $0x28] sm:$0xff]
    %v2670 = vld [vmem:[%s3 + $0x30] sm:$0xff]
    %v2671 = vld [vmem:[%s3 + $0x38] sm:$0xff]
    %v2672 = vld [vmem:[%s3 + $0x40] sm:$0xff]
    %v2673 = vld [vmem:[%s3 + $0x48] sm:$0xff]
    %v2674 = vld [vmem:[%s3 + $0x50] sm:$0xff]
    %v2675 = vld [vmem:[%s3 + $0x58] sm:$0xff]
    %v2676 = vld [vmem:[%s3 + $0x60] sm:$0xff]
    %v2677 = vld [vmem:[%s3 + $0x68] sm:$0xff]
    %v2678 = vld [vmem:[%s3 + $0x70] sm:$0xff]
    %v2679 = vld [vmem:[%s3 + $0x78] sm:$0xff]
    %v2680 = vld [vmem:[%s3 + $0x80] sm:$0xff]
    %v2681 = vld [vmem:[%s3 + $0x88] sm:$0xff]
    %v2682 = vld [vmem:[%s3 + $0x90] sm:$0xff]
    %v2683 = vld [vmem:[%s3 + $0x98] sm:$0xff]
    %v2684 = vld [vmem:[%s3 + $0xa0] sm:$0xff]
    %v2685 = vld [vmem:[%s3 + $0xa8] sm:$0xff]
    %v2686 = vld [vmem:[%s3 + $0xb0] sm:$0xff]
    %v2687 = vld [vmem:[%s3 + $0xb8] sm:$0xff]
    %v2688 = vld [vmem:[%s3 + $0xc0] sm:$0xff]
    %v2689 = vld [vmem:[%s3 + $0xc8] sm:$0xff]
    %v2690 = vld [vmem:[%s3 + $0xd0] sm:$0xff]
    %v2691 = vld [vmem:[%s3 + $0xd8] sm:$0xff]
    %v2692 = vld [vmem:[%s3 + $0xe0] sm:$0xff]
    %v2693 = vld [vmem:[%s3 + $0xe8] sm:$0xff]
    %v2694 = vld [vmem:[%s3 + $0xf0] sm:$0xff]
    %v2695 = vld [vmem:[%s3 + $0xf8] sm:$0xff]
    %v2696 = vpack.c.bf16 %v2662, %v2662
    %v2697 = vpack.c.bf16 %v2663, %v2663
    %s2698 = scalar_lea.vmem %s1, 36
    %v2699 = vld [vmem:[%s2698] ss:$8 sm:$0xf]
    %v2701 = vlaneseq
    %v2702 = vshrl.u32 %v2701, 7
    %v2703 = vsub.s32 0, %v2702
    %v2704 = vrot.slane %v2699, %v2703
    %v2705 = vlaneseq
    %v2706 = vshrl.u32 %v2705, 7
    %v2707 = vsub.s32 1, %v2706
    %v2708 = vrot.slane %v2699, %v2707
    %v2709 = vlaneseq
    %v2710 = vshrl.u32 %v2709, 7
    %v2711 = vsub.s32 2, %v2710
    %v2712 = vrot.slane %v2699, %v2711
    %v2713 = vlaneseq
    %v2714 = vshrl.u32 %v2713, 7
    %v2715 = vsub.s32 3, %v2714
    %v2716 = vrot.slane %v2699, %v2715
    %v2723 = vunpack.c.l.b16 %v2696
    %v2724 = vunpack.c.l.b16 %v2697
    %v2725 = vsel %vm1951, %v2724, %v2723
    %v2726 = vpack.c.b16 %v2725, %v2725
    %v2760 = vunpack.c.l.b16 %v2664
    %v2761 = vunpack.c.h.b16 %v2664
    %v2762 = vunpack.c.l.b16 %v2665
    %v2763 = vunpack.c.h.b16 %v2665
    %v2764 = vunpack.c.l.b16 %v2666
    %v2765 = vunpack.c.h.b16 %v2666
    %v2766 = vunpack.c.l.b16 %v2667
    %v2767 = vunpack.c.h.b16 %v2667
    %v2768 = vunpack.c.l.b16 %v2668
    %v2769 = vunpack.c.h.b16 %v2668
    %v2770 = vunpack.c.l.b16 %v2669
    %v2771 = vunpack.c.h.b16 %v2669
    %v2772 = vunpack.c.l.b16 %v2670
    %v2773 = vunpack.c.h.b16 %v2670
    %v2774 = vunpack.c.l.b16 %v2671
    %v2775 = vunpack.c.h.b16 %v2671
    %v2776 = vunpack.c.l.b16 %v2672
    %v2777 = vunpack.c.h.b16 %v2672
    %v2778 = vunpack.c.l.b16 %v2673
    %v2779 = vunpack.c.h.b16 %v2673
    %v2780 = vunpack.c.l.b16 %v2674
    %v2781 = vunpack.c.h.b16 %v2674
    %v2782 = vunpack.c.l.b16 %v2675
    %v2783 = vunpack.c.h.b16 %v2675
    %v2784 = vunpack.c.l.b16 %v2676
    %v2785 = vunpack.c.h.b16 %v2676
    %v2786 = vunpack.c.l.b16 %v2677
    %v2787 = vunpack.c.h.b16 %v2677
    %v2788 = vunpack.c.l.b16 %v2678
    %v2789 = vunpack.c.h.b16 %v2678
    %v2790 = vunpack.c.l.b16 %v2679
    %v2791 = vunpack.c.h.b16 %v2679
    %v2792 = vunpack.c.l.b16 %v2680
    %v2793 = vunpack.c.h.b16 %v2680
    %v2794 = vunpack.c.l.b16 %v2681
    %v2795 = vunpack.c.h.b16 %v2681
    %v2796 = vunpack.c.l.b16 %v2682
    %v2797 = vunpack.c.h.b16 %v2682
    %v2798 = vunpack.c.l.b16 %v2683
    %v2799 = vunpack.c.h.b16 %v2683
    %v2800 = vunpack.c.l.b16 %v2684
    %v2801 = vunpack.c.h.b16 %v2684
    %v2802 = vunpack.c.l.b16 %v2685
    %v2803 = vunpack.c.h.b16 %v2685
    %v2804 = vunpack.c.l.b16 %v2686
    %v2805 = vunpack.c.h.b16 %v2686
    %v2806 = vunpack.c.l.b16 %v2687
    %v2807 = vunpack.c.h.b16 %v2687
    %v2808 = vunpack.c.l.b16 %v2688
    %v2809 = vunpack.c.h.b16 %v2688
    %v2810 = vunpack.c.l.b16 %v2689
    %v2811 = vunpack.c.h.b16 %v2689
    %v2812 = vunpack.c.l.b16 %v2690
    %v2813 = vunpack.c.h.b16 %v2690
    %v2814 = vunpack.c.l.b16 %v2691
    %v2815 = vunpack.c.h.b16 %v2691
    %v2816 = vunpack.c.l.b16 %v2692
    %v2817 = vunpack.c.h.b16 %v2692
    %v2818 = vunpack.c.l.b16 %v2693
    %v2819 = vunpack.c.h.b16 %v2693
    %v2820 = vunpack.c.l.b16 %v2694
    %v2821 = vunpack.c.h.b16 %v2694
    %v2822 = vunpack.c.l.b16 %v2695
    %v2823 = vunpack.c.h.b16 %v2695
    %v2824 = vpack.c.b16 %v2764, %v2760
    %v2825 = vpack.c.b16 %v2765, %v2761
    %v2826 = vpack.c.b16 %v2766, %v2762
    %v2827 = vpack.c.b16 %v2767, %v2763
    %v2828 = vpack.c.b16 %v2772, %v2768
    %v2829 = vpack.c.b16 %v2773, %v2769
    %v2830 = vpack.c.b16 %v2774, %v2770
    %v2831 = vpack.c.b16 %v2775, %v2771
    %v2832 = vpack.c.b16 %v2780, %v2776
    %v2833 = vpack.c.b16 %v2781, %v2777
    %v2834 = vpack.c.b16 %v2782, %v2778
    %v2835 = vpack.c.b16 %v2783, %v2779
    %v2836 = vpack.c.b16 %v2788, %v2784
    %v2837 = vpack.c.b16 %v2789, %v2785
    %v2838 = vpack.c.b16 %v2790, %v2786
    %v2839 = vpack.c.b16 %v2791, %v2787
    %v2840 = vpack.c.b16 %v2796, %v2792
    %v2841 = vpack.c.b16 %v2797, %v2793
    %v2842 = vpack.c.b16 %v2798, %v2794
    %v2843 = vpack.c.b16 %v2799, %v2795
    %v2844 = vpack.c.b16 %v2804, %v2800
    %v2845 = vpack.c.b16 %v2805, %v2801
    %v2846 = vpack.c.b16 %v2806, %v2802
    %v2847 = vpack.c.b16 %v2807, %v2803
    %v2848 = vpack.c.b16 %v2812, %v2808
    %v2849 = vpack.c.b16 %v2813, %v2809
    %v2850 = vpack.c.b16 %v2814, %v2810
    %v2851 = vpack.c.b16 %v2815, %v2811
    %v2852 = vpack.c.b16 %v2820, %v2816
    %v2853 = vpack.c.b16 %v2821, %v2817
    %v2854 = vpack.c.b16 %v2822, %v2818
    %v2855 = vpack.c.b16 %v2823, %v2819
    %2888 = vmatprep.subr.bf16.mxu0 %v2853
    %2889 = vmatpush1.bf16.msra.mxu0 %v2852
    %2890 = vmatprep.subr.bf16.mxu0 %v2849
    %2891 = vmatpush1.bf16.msra.mxu0 %v2848
    %2892 = vmatprep.subr.bf16.mxu0 %v2845
    %2893 = vmatpush1.bf16.msra.mxu0 %v2844
    %2894 = vmatprep.subr.bf16.mxu0 %v2841
    %2895 = vmatpush1.bf16.msra.mxu0 %v2840
    %2896 = vmatprep.subr.bf16.mxu0 %v2837
    %2897 = vmatpush1.bf16.msra.mxu0 %v2836
    %2898 = vmatprep.subr.bf16.mxu0 %v2833
    %2899 = vmatpush1.bf16.msra.mxu0 %v2832
    %2900 = vmatprep.subr.bf16.mxu0 %v2829
    %2901 = vmatpush1.bf16.msra.mxu0 %v2828
    %2902 = vmatprep.subr.bf16.mxu0 %v2825
    %2903 = vmatpush1.bf16.msra.mxu0 %v2824
    %2904 = vmatprep.subr.bf16.mxu0 0
    %2905 = vmatpush2.bf16.msra.mxu0 0
    %2906 = vmatprep.subr.bf16.mxu0 0
    %2907 = vmatpush2.bf16.msra.mxu0 0
    %2908 = vmatprep.subr.bf16.mxu0 0
    %2909 = vmatpush2.bf16.msra.mxu0 0
    %2910 = vmatprep.subr.bf16.mxu0 0
    %2911 = vmatpush2.bf16.msra.mxu0 0
    %2912 = vmatprep.subr.bf16.mxu0 0
    %2913 = vmatpush2.bf16.msra.mxu0 0
    %2914 = vmatprep.subr.bf16.mxu0 0
    %2915 = vmatpush2.bf16.msra.mxu0 0
    %2916 = vmatprep.subr.bf16.mxu0 0
    %2917 = vmatpush2.bf16.msra.mxu0 0
    %2918 = vmatprep.subr.bf16.mxu0 0
    %2919 = vmatpush2.bf16.msra.mxu0 0
    %2920 = vmatprep.mubr.bf16.mxu0 0
    %2921 = vmatmul.mubr.bf16.gmra.mxu0 %v2726
    %v2922 = vpop.f32.mrf.mxu0
    %v2923 = vadd.f32 %v2704, %v2922
    %v2924 = vpop.f32.mrf.mxu0
    %v2925 = vadd.f32 %v2708, %v2924
    %v2926 = vpop.f32.mrf.mxu0
    %v2927 = vpop.f32.mrf.mxu0
    %2928 = vdwg.mxu0
    %2929 = vmatprep.subr.bf16.mxu0 %v2855
    %2930 = vmatpush1.bf16.msra.mxu0 %v2854
    %2931 = vmatprep.subr.bf16.mxu0 %v2851
    %2932 = vmatpush1.bf16.msra.mxu0 %v2850
    %2933 = vmatprep.subr.bf16.mxu0 %v2847
    %2934 = vmatpush1.bf16.msra.mxu0 %v2846
    %2935 = vmatprep.subr.bf16.mxu0 %v2843
    %2936 = vmatpush1.bf16.msra.mxu0 %v2842
    %2937 = vmatprep.subr.bf16.mxu0 %v2839
    %2938 = vmatpush1.bf16.msra.mxu0 %v2838
    %2939 = vmatprep.subr.bf16.mxu0 %v2835
    %2940 = vmatpush1.bf16.msra.mxu0 %v2834
    %2941 = vmatprep.subr.bf16.mxu0 %v2831
    %2942 = vmatpush1.bf16.msra.mxu0 %v2830
    %2943 = vmatprep.subr.bf16.mxu0 %v2827
    %2944 = vmatpush1.bf16.msra.mxu0 %v2826
    %2945 = vmatprep.subr.bf16.mxu0 0
    %2946 = vmatpush2.bf16.msra.mxu0 0
    %2947 = vmatprep.subr.bf16.mxu0 0
    %2948 = vmatpush2.bf16.msra.mxu0 0
    %2949 = vmatprep.subr.bf16.mxu0 0
    %2950 = vmatpush2.bf16.msra.mxu0 0
    %2951 = vmatprep.subr.bf16.mxu0 0
    %2952 = vmatpush2.bf16.msra.mxu0 0
    %2953 = vmatprep.subr.bf16.mxu0 0
    %2954 = vmatpush2.bf16.msra.mxu0 0
    %2955 = vmatprep.subr.bf16.mxu0 0
    %2956 = vmatpush2.bf16.msra.mxu0 0
    %2957 = vmatprep.subr.bf16.mxu0 0
    %2958 = vmatpush2.bf16.msra.mxu0 0
    %2959 = vmatprep.subr.bf16.mxu0 0
    %2960 = vmatpush2.bf16.msra.mxu0 0
    %2961 = vmatprep.mubr.bf16.mxu0 0
    %2962 = vmatmul.mubr.bf16.gmra.mxu0 %v2726
    %v2963 = vpop.f32.mrf.mxu0
    %v2964 = vadd.f32 %v2712, %v2963
    %v2965 = vpop.f32.mrf.mxu0
    %v2966 = vadd.f32 %v2716, %v2965
    %v2967 = vpop.f32.mrf.mxu0
    %v2968 = vpop.f32.mrf.mxu0
    %2969 = vdwg.mxu0
    %v2974 = vcombine.low %v2923, %v2925
    %v2975 = vcombine.low %v2964, %v2966
    %v2977 = vunpack.c.l.s4 1983009808
    %v2978 = vunpack.c.0.s8 %v2977
    %v2979 = vlaneseq
    %v2980 = vshrl.u32 %v2979, 7
    %v2981 = vsub.s32 %v2978, %v2980
    %v2982 = vrot.slane %v2974, %v2981
    %v2984 = vunpack.c.l.s4 1983009808
    %v2985 = vunpack.c.0.s8 %v2984
    %v2986 = vlaneseq
    %v2987 = vshrl.u32 %v2986, 7
    %v2988 = vsub.s32 %v2985, %v2987
    %v2989 = vrot.slane %v2975, %v2988
    %v2990 = vcombine.low %v2982, %v2989
    %2992 = vst [vmem:[#allocation3] sm:$0xff] %v2990
    // Predicated region
    $region18: #{_efficientnet_forward.1} parent=1 // pred_check
      _
    $region19: #{_efficientnet_forward.1} parent=1 // pred_check_branch
      %2994 = sbr.rel (0) target = $region21
    $region20: #{_efficientnet_forward.1} parent=1 // pred_region
      %s2996 = ssub.s32 128, 128
      %2997 = vsyncadd [#allocation4], %s2996
      %s2999 = sshll.u32 [#allocation3], 4
      %s3000 = int_to_ptr.vmem [resolvable:$true] %s2999
      %3002 = dma.vmem_to_hbm [thread:$0]  %s3000, 128, %s4, [#allocation4]
    $region21: #{_efficientnet_forward.1} parent=1 // pred_fallthru
      _
    // Predicated region
    $region22: #{_efficientnet_forward.1} parent=1 // pred_check
      _
    $region23: #{_efficientnet_forward.1} parent=1 // pred_check_branch
      %3004 = sbr.rel (0) target = $region25
    $region24: #{_efficientnet_forward.1} parent=1 // pred_region
      %3005 = dma.done [#allocation4], 128
    $region25: #{_efficientnet_forward.1} parent=1 // pred_fallthru
      _
    %3006 = vsyncpa [#allocation4], 1

</llo_original>
